<compile_context>
chip_gen: v6e
topology: v6e:2x2x1
jax: 0.10.0
libtpu: 0.0.40
codegen_flags: <defaults>
</compile_context>

<pallas_src>
import math
import functools

import jax
import jax.numpy as jnp
from jax.experimental import pallas as pl
from jax.experimental.pallas import tpu as pltpu


def _layer_norm(x, g, b, eps=1e-5):
    mean = jnp.mean(x, axis=-1, keepdims=True)
    var = jnp.mean((x - mean) ** 2, axis=-1, keepdims=True)
    return (x - mean) * jax.lax.rsqrt(var + eps) * g + b


def clip_layer_kernel(n_heads,
                      x_ref,      # (1, S, D)  activations for this batch elem
                      w_in_ref,   # (D, 3D)    packed q/k/v projection (cdt)
                      b_in_ref,   # (1, 3D)    f32
                      w_out_ref,  # (D, D)     out projection (cdt)
                      vecs_ref,   # (6, D) f32: ln1_g, ln1_b, b_out, ln2_g, ln2_b, b2
                      w1_ref,     # (D, 4D)    (cdt)
                      b1_ref,     # (1, 4D)    f32
                      w2_ref,     # (4D, D)    (cdt)
                      o_ref):     # (1, S, D)
    _, S, D = x_ref.shape
    H = n_heads
    dh = D // H
    scale = 1.0 / math.sqrt(dh)
    cdt = w_in_ref.dtype              # matmul operand dtype (f32 or bf16)

    vecs = vecs_ref[...]
    ln1_g, ln1_b = vecs[0:1], vecs[1:2]
    b_out = vecs[2:3]
    ln2_g, ln2_b = vecs[3:4], vecs[4:5]
    b2 = vecs[5:6]

    xb = x_ref[0]                                       # (S, D) f32

    # ---------------- block 1: LN -> causal MHA -> residual -----------------
    h = _layer_norm(xb, ln1_g, ln1_b)                   # f32 elementwise math

    # Single lane-dense projection for q, k, v (f32 accumulation).
    qkv = jnp.dot(h.astype(cdt), w_in_ref[...],
                  preferred_element_type=jnp.float32) + b_in_ref[...]   # (S, 3D)

    # Strict upper-triangle causal mask (never masks a full row, so -inf is safe).
    row = jax.lax.broadcasted_iota(jnp.int32, (S, S), 0)
    col = jax.lax.broadcasted_iota(jnp.int32, (S, S), 1)
    causal = col > row

    ctx_parts = []
    for hh in range(H):                                 # per-head attention math
        qh = qkv[:, hh * dh:(hh + 1) * dh].astype(cdt)              # (S, dh)
        kh = qkv[:, D + hh * dh:D + (hh + 1) * dh].astype(cdt)      # (S, dh)
        vh = qkv[:, 2 * D + hh * dh:2 * D + (hh + 1) * dh].astype(cdt)

        s = jax.lax.dot_general(qh, kh, (((1,), (1,)), ((), ())),
                                preferred_element_type=jnp.float32) * scale
        s = jnp.where(causal, -jnp.inf, s)
        m = jnp.max(s, axis=-1, keepdims=True)
        p = jnp.exp(s - m)
        p = p / jnp.sum(p, axis=-1, keepdims=True)      # exact divide (f32)

        ctx_parts.append(jnp.dot(p.astype(cdt), vh,
                                 preferred_element_type=jnp.float32))  # (S, dh)

    ctx = jnp.concatenate(ctx_parts, axis=-1)           # (S, D) lane-merged heads

    attn = jnp.dot(ctx.astype(cdt), w_out_ref[...],     # single full-K out-proj
                   preferred_element_type=jnp.float32) + b_out
    x1 = attn + xb                                      # residual 1

    # ---------------- block 2: LN -> MLP (quickGELU) -> residual -------------
    h2 = _layer_norm(x1, ln2_g, ln2_b)
    m1 = jnp.dot(h2.astype(cdt), w1_ref[...],
                 preferred_element_type=jnp.float32) + b1_ref[...]
    g = m1 * jax.nn.sigmoid(1.702 * m1)                 # quickGELU, f32
    m2 = jnp.dot(g.astype(cdt), w2_ref[...],
                 preferred_element_type=jnp.float32) + b2
    o_ref[0] = (m2 + x1).astype(o_ref.dtype)            # residual 2


def clip_layer(x, params, n_heads, compute_dtype=None):
    """Fused CLIP encoder layer. x: (B, S, D); params as in the torch module."""
    B, S, D = x.shape
    (ln1_g, ln1_b, w_in, b_in, w_out, b_out,
     ln2_g, ln2_b, w1, b1, w2, b2) = params

    # bf16 MXU operands at real CLIP sizes; keep f32 at tiny/lane-sparse sizes.
    if compute_dtype is None:
        compute_dtype = jnp.bfloat16 if D >= 256 else jnp.float32
    cdt = jnp.dtype(compute_dtype)

    # One-time host-side repack: weights to the compute dtype, small (1, D)
    # vectors packed into a single (6, D) input (one DMA instead of six).
    w_in_c = w_in.astype(cdt)
    w_out_c = w_out.astype(cdt)
    w1_c = w1.astype(cdt)
    w2_c = w2.astype(cdt)
    b_in_f = b_in.astype(jnp.float32)
    b1_f = b1.astype(jnp.float32)
    vecs = jnp.concatenate([ln1_g, ln1_b, b_out, ln2_g, ln2_b, b2],
                           axis=0).astype(jnp.float32)

    # VMEM budget: resident weights (+double-buffered activation blocks) + slack.
    weight_bytes = sum(int(a.size) * a.dtype.itemsize
                       for a in (w_in_c, w_out_c, w1_c, w2_c))
    vmem_limit = int(min(max(2 * weight_bytes + (16 << 20), 32 << 20), 64 << 20))

    kernel = functools.partial(clip_layer_kernel, n_heads)
    const2 = lambda b: (0, 0)      # weights: same block every step -> resident

    return pl.pallas_call(
        kernel,
        out_shape=jax.ShapeDtypeStruct((B, S, D), x.dtype),
        grid=(B,),
        in_specs=[
            pl.BlockSpec((1, S, D), lambda b: (b, 0, 0)),   # x (per-batch block)
            pl.BlockSpec((D, 3 * D), const2),               # w_in
            pl.BlockSpec((1, 3 * D), const2),               # b_in
            pl.BlockSpec((D, D), const2),                   # w_out
            pl.BlockSpec((6, D), const2),                   # packed vectors
            pl.BlockSpec((D, 4 * D), const2),               # w1
            pl.BlockSpec((1, 4 * D), const2),               # b1
            pl.BlockSpec((4 * D, D), const2),               # w2
        ],
        out_specs=pl.BlockSpec((1, S, D), lambda b: (b, 0, 0)),
        compiler_params=pltpu.CompilerParams(
            dimension_semantics=("parallel",),               # v7x: 2 TCs over batch
            vmem_limit_bytes=vmem_limit),
    )(x, w_in_c, b_in_f, w_out_c, vecs, w1_c, b1_f, w2_c)


# ---------------- pure-JAX reference (for correctness check) -----------------
def clip_layer_ref(x, params, n_heads):
    (ln1_g, ln1_b, w_in, b_in, w_out, b_out,
     ln2_g, ln2_b, w1, b1, w2, b2) = params
    B, S, D = x.shape
    dh = D // n_heads

    residue = x
    h = _layer_norm(x, ln1_g, ln1_b)
    qkv = h @ w_in + b_in
    q, k, v = jnp.split(qkv, 3, axis=-1)
    q = q.reshape(B, S, n_heads, dh).transpose(0, 2, 1, 3)
    k = k.reshape(B, S, n_heads, dh).transpose(0, 2, 1, 3)
    v = v.reshape(B, S, n_heads, dh).transpose(0, 2, 1, 3)
    w = jnp.einsum("bhqd,bhkd->bhqk", q, k)
    mask = jnp.triu(jnp.ones((S, S), bool), 1)
    w = jnp.where(mask, -jnp.inf, w) / math.sqrt(dh)
    w = jax.nn.softmax(w, axis=-1)
    o = jnp.einsum("bhqk,bhkd->bhqd", w, v).transpose(0, 2, 1, 3).reshape(B, S, D)
    o = o @ w_out + b_out
    x1 = o + residue

    residue2 = x1
    h2 = _layer_norm(x1, ln2_g, ln2_b)
    m = h2 @ w1 + b1
    m = m * jax.nn.sigmoid(1.702 * m)
    m = m @ w2 + b2
    return m + residue2


def _make_params(key, D):
    ks = jax.random.split(key, 11)

    def init(k, shape, scale=0.05):
        return (scale * jax.random.normal(k, shape)).astype(jnp.float32)

    return (
        jnp.ones((1, D), jnp.float32) + init(ks[0], (1, D)),   # ln1 gamma
        init(ks[1], (1, D)),                                   # ln1 beta
        init(ks[2], (D, 3 * D)),                               # in_proj weight
        init(ks[3], (1, 3 * D)),                               # in_proj bias
        init(ks[4], (D, D)),                                   # out_proj weight
        init(ks[5], (1, D)),                                   # out_proj bias
        jnp.ones((1, D), jnp.float32) + init(ks[6], (1, D)),   # ln2 gamma
        init(ks[7], (1, D)),                                   # ln2 beta
        init(ks[8], (D, 4 * D)),                               # linear_1 weight
        init(ks[9], (1, 4 * D)),                               # linear_1 bias
        init(ks[10], (4 * D, D)),                              # linear_2 weight
        jnp.zeros((1, D), jnp.float32),                        # linear_2 bias
    )


if __name__ == "__main__":
    key = jax.random.PRNGKey(0)
    k_small, k_big = jax.random.split(key)

    # ---- test 1: small shape, f32 compute path ----
    B, S, D, H = 2, 8, 32, 4
    kx, kp = jax.random.split(k_small)
    x = jax.random.normal(kx, (B, S, D), dtype=jnp.float32)
    params = _make_params(kp, D)

    out = jax.block_until_ready(clip_layer(x, params, H, compute_dtype=jnp.float32))
    ref = clip_layer_ref(x, params, H)
    assert out.shape == (B, S, D)
    assert jnp.allclose(out, ref, atol=2e-3, rtol=2e-3), \
        float(jnp.max(jnp.abs(out - ref)))

    # ---- test 2: slightly larger shape, bf16 MXU-operand path ----
    B2, S2, D2, H2 = 2, 16, 128, 4
    kx2, kp2 = jax.random.split(k_big)
    x2 = jax.random.normal(kx2, (B2, S2, D2), dtype=jnp.float32)
    params2 = _make_params(kp2, D2)

    out2 = jax.block_until_ready(
        clip_layer(x2, params2, H2, compute_dtype=jnp.bfloat16))
    ref2 = clip_layer_ref(x2, params2, H2)
    assert out2.shape == (B2, S2, D2)
    assert jnp.allclose(out2, ref2, atol=5e-2, rtol=5e-2), \
        float(jnp.max(jnp.abs(out2 - ref2)))

    print("KERNEL_OK")
</pallas_src>

<mosaic_0001>
module attributes {stable_mosaic.version = 11 : i64} {
  func.func @clip_layer_kernel(%arg0: i32, %arg1: memref<1x8x32xf32, #tpu.memory_space<vmem>>, %arg2: memref<32x96xf32, #tpu.memory_space<vmem>>, %arg3: memref<1x96xf32, #tpu.memory_space<vmem>>, %arg4: memref<32x32xf32, #tpu.memory_space<vmem>>, %arg5: memref<6x32xf32, #tpu.memory_space<vmem>>, %arg6: memref<32x128xf32, #tpu.memory_space<vmem>>, %arg7: memref<1x128xf32, #tpu.memory_space<vmem>>, %arg8: memref<128x32xf32, #tpu.memory_space<vmem>>, %arg9: memref<1x8x32xf32, #tpu.memory_space<vmem>>) attributes {dimension_semantics = [#tpu.dimension_semantics<parallel>], iteration_bounds = array<i64: 2>, scalar_prefetch = 0 : i64, scratch_operands = 0 : i64, tpu.core_type = #tpu.core_type<tc>, window_params = [{transform_indices = @transform_0, window_bounds = array<i64: 1, 8, 32>}, {pipeline_mode = #tpu.pipeline_mode<synchronous>, transform_indices = @transform_1, window_bounds = array<i64: 32, 96>}, {pipeline_mode = #tpu.pipeline_mode<synchronous>, transform_indices = @transform_2, window_bounds = array<i64: 1, 96>}, {pipeline_mode = #tpu.pipeline_mode<synchronous>, transform_indices = @transform_3, window_bounds = array<i64: 32, 32>}, {pipeline_mode = #tpu.pipeline_mode<synchronous>, transform_indices = @transform_4, window_bounds = array<i64: 6, 32>}, {pipeline_mode = #tpu.pipeline_mode<synchronous>, transform_indices = @transform_5, window_bounds = array<i64: 32, 128>}, {pipeline_mode = #tpu.pipeline_mode<synchronous>, transform_indices = @transform_6, window_bounds = array<i64: 1, 128>}, {pipeline_mode = #tpu.pipeline_mode<synchronous>, transform_indices = @transform_7, window_bounds = array<i64: 128, 32>}, {transform_indices = @transform_8, window_bounds = array<i64: 1, 8, 32>}]} {
    %c0 = arith.constant 0 : index
    %c0_0 = arith.constant 0 : index
    %0 = vector.load %arg5[%c0, %c0_0] : memref<6x32xf32, #tpu.memory_space<vmem>>, vector<6x32xf32>
    %1 = vector.extract_strided_slice %0 {offsets = [0, 0], sizes = [1, 32], strides = [1, 1]} : vector<6x32xf32> to vector<1x32xf32>
    %2 = vector.extract_strided_slice %0 {offsets = [1, 0], sizes = [1, 32], strides = [1, 1]} : vector<6x32xf32> to vector<1x32xf32>
    %3 = vector.extract_strided_slice %0 {offsets = [2, 0], sizes = [1, 32], strides = [1, 1]} : vector<6x32xf32> to vector<1x32xf32>
    %4 = vector.extract_strided_slice %0 {offsets = [3, 0], sizes = [1, 32], strides = [1, 1]} : vector<6x32xf32> to vector<1x32xf32>
    %5 = vector.extract_strided_slice %0 {offsets = [4, 0], sizes = [1, 32], strides = [1, 1]} : vector<6x32xf32> to vector<1x32xf32>
    %6 = vector.extract_strided_slice %0 {offsets = [5, 0], sizes = [1, 32], strides = [1, 1]} : vector<6x32xf32> to vector<1x32xf32>
    %c0_1 = arith.constant 0 : index
    %c0_2 = arith.constant 0 : index
    %c0_3 = arith.constant 0 : index
    %7 = vector.load %arg1[%c0_1, %c0_2, %c0_3] : memref<1x8x32xf32, #tpu.memory_space<vmem>>, vector<1x8x32xf32>
    %8 = vector.shape_cast %7 : vector<1x8x32xf32> to vector<8x32xf32>
    %cst = arith.constant dense<0.000000e+00> : vector<8xf32>
    %9 = vector.multi_reduction <add>, %8, %cst [1] : vector<8x32xf32> to vector<8xf32>
    %10 = vector.shape_cast %9 : vector<8xf32> to vector<8x1xf32>
    %cst_4 = arith.constant 3.200000e+01 : f32
    %11 = vector.broadcast %cst_4 : f32 to vector<8x1xf32>
    %12 = arith.divf %10, %11 : vector<8x1xf32>
    %13 = vector.broadcast %12 : vector<8x1xf32> to vector<8x32xf32>
    %14 = arith.subf %8, %13 : vector<8x32xf32>
    %15 = arith.mulf %14, %14 : vector<8x32xf32>
    %cst_5 = arith.constant dense<0.000000e+00> : vector<8xf32>
    %16 = vector.multi_reduction <add>, %15, %cst_5 [1] : vector<8x32xf32> to vector<8xf32>
    %17 = vector.shape_cast %16 : vector<8xf32> to vector<8x1xf32>
    %cst_6 = arith.constant 3.200000e+01 : f32
    %18 = vector.broadcast %cst_6 : f32 to vector<8x1xf32>
    %19 = arith.divf %17, %18 : vector<8x1xf32>
    %20 = vector.broadcast %12 : vector<8x1xf32> to vector<8x32xf32>
    %21 = arith.subf %8, %20 : vector<8x32xf32>
    %cst_7 = arith.constant 9.99999974E-6 : f32
    %22 = vector.broadcast %cst_7 : f32 to vector<8x1xf32>
    %23 = arith.addf %19, %22 : vector<8x1xf32>
    %24 = math.rsqrt %23 : vector<8x1xf32>
    %25 = vector.broadcast %24 : vector<8x1xf32> to vector<8x32xf32>
    %26 = arith.mulf %21, %25 : vector<8x32xf32>
    %27 = vector.broadcast %1 : vector<1x32xf32> to vector<8x32xf32>
    %28 = arith.mulf %26, %27 : vector<8x32xf32>
    %29 = vector.broadcast %2 : vector<1x32xf32> to vector<8x32xf32>
    %30 = arith.addf %28, %29 : vector<8x32xf32>
    %c0_8 = arith.constant 0 : index
    %c0_9 = arith.constant 0 : index
    %31 = vector.load %arg2[%c0_8, %c0_9] : memref<32x96xf32, #tpu.memory_space<vmem>>, vector<32x96xf32>
    %cst_10 = arith.constant dense<0.000000e+00> : vector<8x96xf32>
    %32 = tpu.matmul %30, %31, %cst_10 {dimension_numbers = #tpu.dot_dimension_numbers<[1], [0], [0], [1], [0, 0, 1, 1], [], []>} : vector<8x32xf32>, vector<32x96xf32>, vector<8x96xf32> -> vector<8x96xf32>
    %c0_11 = arith.constant 0 : index
    %c0_12 = arith.constant 0 : index
    %33 = vector.load %arg3[%c0_11, %c0_12] : memref<1x96xf32, #tpu.memory_space<vmem>>, vector<1x96xf32>
    %34 = vector.broadcast %33 : vector<1x96xf32> to vector<8x96xf32>
    %35 = arith.addf %32, %34 : vector<8x96xf32>
    %36 = tpu.iota {dimensions = array<i32: 0>} : vector<8x8xi32>
    %37 = tpu.iota {dimensions = array<i32: 1>} : vector<8x8xi32>
    %38 = arith.cmpi sgt, %37, %36 : vector<8x8xi32>
    %39 = vector.extract_strided_slice %35 {offsets = [0, 0], sizes = [8, 8], strides = [1, 1]} : vector<8x96xf32> to vector<8x8xf32>
    %40 = vector.extract_strided_slice %35 {offsets = [0, 32], sizes = [8, 8], strides = [1, 1]} : vector<8x96xf32> to vector<8x8xf32>
    %41 = vector.extract_strided_slice %35 {offsets = [0, 64], sizes = [8, 8], strides = [1, 1]} : vector<8x96xf32> to vector<8x8xf32>
    %cst_13 = arith.constant dense<0.000000e+00> : vector<8x8xf32>
    %42 = tpu.matmul %39, %40, %cst_13 {dimension_numbers = #tpu.dot_dimension_numbers<[1], [1], [0], [0], [0, 0, 1, 0], [], []>} : vector<8x8xf32>, vector<8x8xf32>, vector<8x8xf32> -> vector<8x8xf32>
    %cst_14 = arith.constant 0.353553385 : f32
    %43 = vector.broadcast %cst_14 : f32 to vector<8x8xf32>
    %44 = arith.mulf %42, %43 : vector<8x8xf32>
    %cst_15 = arith.constant 0xFF800000 : f32
    %45 = vector.broadcast %cst_15 : f32 to vector<8x8xf32>
    %46 = arith.select %38, %45, %44 : vector<8x8xi1>, vector<8x8xf32>
    %cst_16 = arith.constant dense<0xFF800000> : vector<8xf32>
    %47 = vector.multi_reduction <maximumf>, %46, %cst_16 [1] : vector<8x8xf32> to vector<8xf32>
    %48 = vector.shape_cast %47 : vector<8xf32> to vector<8x1xf32>
    %49 = vector.broadcast %48 : vector<8x1xf32> to vector<8x8xf32>
    %50 = arith.subf %46, %49 : vector<8x8xf32>
    %51 = math.exp %50 : vector<8x8xf32>
    %cst_17 = arith.constant dense<0.000000e+00> : vector<8xf32>
    %52 = vector.multi_reduction <add>, %51, %cst_17 [1] : vector<8x8xf32> to vector<8xf32>
    %53 = vector.shape_cast %52 : vector<8xf32> to vector<8x1xf32>
    %54 = vector.broadcast %53 : vector<8x1xf32> to vector<8x8xf32>
    %55 = arith.divf %51, %54 : vector<8x8xf32>
    %cst_18 = arith.constant dense<0.000000e+00> : vector<8x8xf32>
    %56 = tpu.matmul %55, %41, %cst_18 {dimension_numbers = #tpu.dot_dimension_numbers<[1], [0], [0], [1], [0, 0, 1, 1], [], []>} : vector<8x8xf32>, vector<8x8xf32>, vector<8x8xf32> -> vector<8x8xf32>
    %57 = vector.extract_strided_slice %35 {offsets = [0, 8], sizes = [8, 8], strides = [1, 1]} : vector<8x96xf32> to vector<8x8xf32>
    %58 = vector.extract_strided_slice %35 {offsets = [0, 40], sizes = [8, 8], strides = [1, 1]} : vector<8x96xf32> to vector<8x8xf32>
    %59 = vector.extract_strided_slice %35 {offsets = [0, 72], sizes = [8, 8], strides = [1, 1]} : vector<8x96xf32> to vector<8x8xf32>
    %cst_19 = arith.constant dense<0.000000e+00> : vector<8x8xf32>
    %60 = tpu.matmul %57, %58, %cst_19 {dimension_numbers = #tpu.dot_dimension_numbers<[1], [1], [0], [0], [0, 0, 1, 0], [], []>} : vector<8x8xf32>, vector<8x8xf32>, vector<8x8xf32> -> vector<8x8xf32>
    %cst_20 = arith.constant 0.353553385 : f32
    %61 = vector.broadcast %cst_20 : f32 to vector<8x8xf32>
    %62 = arith.mulf %60, %61 : vector<8x8xf32>
    %cst_21 = arith.constant 0xFF800000 : f32
    %63 = vector.broadcast %cst_21 : f32 to vector<8x8xf32>
    %64 = arith.select %38, %63, %62 : vector<8x8xi1>, vector<8x8xf32>
    %cst_22 = arith.constant dense<0xFF800000> : vector<8xf32>
    %65 = vector.multi_reduction <maximumf>, %64, %cst_22 [1] : vector<8x8xf32> to vector<8xf32>
    %66 = vector.shape_cast %65 : vector<8xf32> to vector<8x1xf32>
    %67 = vector.broadcast %66 : vector<8x1xf32> to vector<8x8xf32>
    %68 = arith.subf %64, %67 : vector<8x8xf32>
    %69 = math.exp %68 : vector<8x8xf32>
    %cst_23 = arith.constant dense<0.000000e+00> : vector<8xf32>
    %70 = vector.multi_reduction <add>, %69, %cst_23 [1] : vector<8x8xf32> to vector<8xf32>
    %71 = vector.shape_cast %70 : vector<8xf32> to vector<8x1xf32>
    %72 = vector.broadcast %71 : vector<8x1xf32> to vector<8x8xf32>
    %73 = arith.divf %69, %72 : vector<8x8xf32>
    %cst_24 = arith.constant dense<0.000000e+00> : vector<8x8xf32>
    %74 = tpu.matmul %73, %59, %cst_24 {dimension_numbers = #tpu.dot_dimension_numbers<[1], [0], [0], [1], [0, 0, 1, 1], [], []>} : vector<8x8xf32>, vector<8x8xf32>, vector<8x8xf32> -> vector<8x8xf32>
    %75 = vector.extract_strided_slice %35 {offsets = [0, 16], sizes = [8, 8], strides = [1, 1]} : vector<8x96xf32> to vector<8x8xf32>
    %76 = vector.extract_strided_slice %35 {offsets = [0, 48], sizes = [8, 8], strides = [1, 1]} : vector<8x96xf32> to vector<8x8xf32>
    %77 = vector.extract_strided_slice %35 {offsets = [0, 80], sizes = [8, 8], strides = [1, 1]} : vector<8x96xf32> to vector<8x8xf32>
    %cst_25 = arith.constant dense<0.000000e+00> : vector<8x8xf32>
    %78 = tpu.matmul %75, %76, %cst_25 {dimension_numbers = #tpu.dot_dimension_numbers<[1], [1], [0], [0], [0, 0, 1, 0], [], []>} : vector<8x8xf32>, vector<8x8xf32>, vector<8x8xf32> -> vector<8x8xf32>
    %cst_26 = arith.constant 0.353553385 : f32
    %79 = vector.broadcast %cst_26 : f32 to vector<8x8xf32>
    %80 = arith.mulf %78, %79 : vector<8x8xf32>
    %cst_27 = arith.constant 0xFF800000 : f32
    %81 = vector.broadcast %cst_27 : f32 to vector<8x8xf32>
    %82 = arith.select %38, %81, %80 : vector<8x8xi1>, vector<8x8xf32>
    %cst_28 = arith.constant dense<0xFF800000> : vector<8xf32>
    %83 = vector.multi_reduction <maximumf>, %82, %cst_28 [1] : vector<8x8xf32> to vector<8xf32>
    %84 = vector.shape_cast %83 : vector<8xf32> to vector<8x1xf32>
    %85 = vector.broadcast %84 : vector<8x1xf32> to vector<8x8xf32>
    %86 = arith.subf %82, %85 : vector<8x8xf32>
    %87 = math.exp %86 : vector<8x8xf32>
    %cst_29 = arith.constant dense<0.000000e+00> : vector<8xf32>
    %88 = vector.multi_reduction <add>, %87, %cst_29 [1] : vector<8x8xf32> to vector<8xf32>
    %89 = vector.shape_cast %88 : vector<8xf32> to vector<8x1xf32>
    %90 = vector.broadcast %89 : vector<8x1xf32> to vector<8x8xf32>
    %91 = arith.divf %87, %90 : vector<8x8xf32>
    %cst_30 = arith.constant dense<0.000000e+00> : vector<8x8xf32>
    %92 = tpu.matmul %91, %77, %cst_30 {dimension_numbers = #tpu.dot_dimension_numbers<[1], [0], [0], [1], [0, 0, 1, 1], [], []>} : vector<8x8xf32>, vector<8x8xf32>, vector<8x8xf32> -> vector<8x8xf32>
    %93 = vector.extract_strided_slice %35 {offsets = [0, 24], sizes = [8, 8], strides = [1, 1]} : vector<8x96xf32> to vector<8x8xf32>
    %94 = vector.extract_strided_slice %35 {offsets = [0, 56], sizes = [8, 8], strides = [1, 1]} : vector<8x96xf32> to vector<8x8xf32>
    %95 = vector.extract_strided_slice %35 {offsets = [0, 88], sizes = [8, 8], strides = [1, 1]} : vector<8x96xf32> to vector<8x8xf32>
    %cst_31 = arith.constant dense<0.000000e+00> : vector<8x8xf32>
    %96 = tpu.matmul %93, %94, %cst_31 {dimension_numbers = #tpu.dot_dimension_numbers<[1], [1], [0], [0], [0, 0, 1, 0], [], []>} : vector<8x8xf32>, vector<8x8xf32>, vector<8x8xf32> -> vector<8x8xf32>
    %cst_32 = arith.constant 0.353553385 : f32
    %97 = vector.broadcast %cst_32 : f32 to vector<8x8xf32>
    %98 = arith.mulf %96, %97 : vector<8x8xf32>
    %cst_33 = arith.constant 0xFF800000 : f32
    %99 = vector.broadcast %cst_33 : f32 to vector<8x8xf32>
    %100 = arith.select %38, %99, %98 : vector<8x8xi1>, vector<8x8xf32>
    %cst_34 = arith.constant dense<0xFF800000> : vector<8xf32>
    %101 = vector.multi_reduction <maximumf>, %100, %cst_34 [1] : vector<8x8xf32> to vector<8xf32>
    %102 = vector.shape_cast %101 : vector<8xf32> to vector<8x1xf32>
    %103 = vector.broadcast %102 : vector<8x1xf32> to vector<8x8xf32>
    %104 = arith.subf %100, %103 : vector<8x8xf32>
    %105 = math.exp %104 : vector<8x8xf32>
    %cst_35 = arith.constant dense<0.000000e+00> : vector<8xf32>
    %106 = vector.multi_reduction <add>, %105, %cst_35 [1] : vector<8x8xf32> to vector<8xf32>
    %107 = vector.shape_cast %106 : vector<8xf32> to vector<8x1xf32>
    %108 = vector.broadcast %107 : vector<8x1xf32> to vector<8x8xf32>
    %109 = arith.divf %105, %108 : vector<8x8xf32>
    %cst_36 = arith.constant dense<0.000000e+00> : vector<8x8xf32>
    %110 = tpu.matmul %109, %95, %cst_36 {dimension_numbers = #tpu.dot_dimension_numbers<[1], [0], [0], [1], [0, 0, 1, 1], [], []>} : vector<8x8xf32>, vector<8x8xf32>, vector<8x8xf32> -> vector<8x8xf32>
    %111 = tpu.concatenate %56, %74, %92, %110 in 1 : vector<8x8xf32>, vector<8x8xf32>, vector<8x8xf32>, vector<8x8xf32> -> vector<8x32xf32>
    %c0_37 = arith.constant 0 : index
    %c0_38 = arith.constant 0 : index
    %112 = vector.load %arg4[%c0_37, %c0_38] : memref<32x32xf32, #tpu.memory_space<vmem>>, vector<32x32xf32>
    %cst_39 = arith.constant dense<0.000000e+00> : vector<8x32xf32>
    %113 = tpu.matmul %111, %112, %cst_39 {dimension_numbers = #tpu.dot_dimension_numbers<[1], [0], [0], [1], [0, 0, 1, 1], [], []>} : vector<8x32xf32>, vector<32x32xf32>, vector<8x32xf32> -> vector<8x32xf32>
    %114 = vector.broadcast %3 : vector<1x32xf32> to vector<8x32xf32>
    %115 = arith.addf %113, %114 : vector<8x32xf32>
    %116 = arith.addf %115, %8 : vector<8x32xf32>
    %cst_40 = arith.constant dense<0.000000e+00> : vector<8xf32>
    %117 = vector.multi_reduction <add>, %116, %cst_40 [1] : vector<8x32xf32> to vector<8xf32>
    %118 = vector.shape_cast %117 : vector<8xf32> to vector<8x1xf32>
    %cst_41 = arith.constant 3.200000e+01 : f32
    %119 = vector.broadcast %cst_41 : f32 to vector<8x1xf32>
    %120 = arith.divf %118, %119 : vector<8x1xf32>
    %121 = vector.broadcast %120 : vector<8x1xf32> to vector<8x32xf32>
    %122 = arith.subf %116, %121 : vector<8x32xf32>
    %123 = arith.mulf %122, %122 : vector<8x32xf32>
    %cst_42 = arith.constant dense<0.000000e+00> : vector<8xf32>
    %124 = vector.multi_reduction <add>, %123, %cst_42 [1] : vector<8x32xf32> to vector<8xf32>
    %125 = vector.shape_cast %124 : vector<8xf32> to vector<8x1xf32>
    %cst_43 = arith.constant 3.200000e+01 : f32
    %126 = vector.broadcast %cst_43 : f32 to vector<8x1xf32>
    %127 = arith.divf %125, %126 : vector<8x1xf32>
    %128 = vector.broadcast %120 : vector<8x1xf32> to vector<8x32xf32>
    %129 = arith.subf %116, %128 : vector<8x32xf32>
    %cst_44 = arith.constant 9.99999974E-6 : f32
    %130 = vector.broadcast %cst_44 : f32 to vector<8x1xf32>
    %131 = arith.addf %127, %130 : vector<8x1xf32>
    %132 = math.rsqrt %131 : vector<8x1xf32>
    %133 = vector.broadcast %132 : vector<8x1xf32> to vector<8x32xf32>
    %134 = arith.mulf %129, %133 : vector<8x32xf32>
    %135 = vector.broadcast %4 : vector<1x32xf32> to vector<8x32xf32>
    %136 = arith.mulf %134, %135 : vector<8x32xf32>
    %137 = vector.broadcast %5 : vector<1x32xf32> to vector<8x32xf32>
    %138 = arith.addf %136, %137 : vector<8x32xf32>
    %c0_45 = arith.constant 0 : index
    %c0_46 = arith.constant 0 : index
    %139 = vector.load %arg6[%c0_45, %c0_46] : memref<32x128xf32, #tpu.memory_space<vmem>>, vector<32x128xf32>
    %cst_47 = arith.constant dense<0.000000e+00> : vector<8x128xf32>
    %140 = tpu.matmul %138, %139, %cst_47 {dimension_numbers = #tpu.dot_dimension_numbers<[1], [0], [0], [1], [0, 0, 1, 1], [], []>} : vector<8x32xf32>, vector<32x128xf32>, vector<8x128xf32> -> vector<8x128xf32>
    %c0_48 = arith.constant 0 : index
    %c0_49 = arith.constant 0 : index
    %141 = vector.load %arg7[%c0_48, %c0_49] : memref<1x128xf32, #tpu.memory_space<vmem>>, vector<1x128xf32>
    %142 = vector.broadcast %141 : vector<1x128xf32> to vector<8x128xf32>
    %143 = arith.addf %140, %142 : vector<8x128xf32>
    %cst_50 = arith.constant 1.702000e+00 : f32
    %144 = vector.broadcast %cst_50 : f32 to vector<8x128xf32>
    %145 = arith.mulf %144, %143 : vector<8x128xf32>
    %146 = arith.negf %145 : vector<8x128xf32>
    %147 = math.exp %146 : vector<8x128xf32>
    %cst_51 = arith.constant 1.000000e+00 : f32
    %148 = vector.broadcast %cst_51 : f32 to vector<8x128xf32>
    %149 = arith.addf %148, %147 : vector<8x128xf32>
    %150 = arith.divf %148, %149 : vector<8x128xf32>
    %151 = arith.mulf %143, %150 : vector<8x128xf32>
    %c0_52 = arith.constant 0 : index
    %c0_53 = arith.constant 0 : index
    %152 = vector.load %arg8[%c0_52, %c0_53] : memref<128x32xf32, #tpu.memory_space<vmem>>, vector<128x32xf32>
    %cst_54 = arith.constant dense<0.000000e+00> : vector<8x32xf32>
    %153 = tpu.matmul %151, %152, %cst_54 {dimension_numbers = #tpu.dot_dimension_numbers<[1], [0], [0], [1], [0, 0, 1, 1], [], []>} : vector<8x128xf32>, vector<128x32xf32>, vector<8x32xf32> -> vector<8x32xf32>
    %154 = vector.broadcast %6 : vector<1x32xf32> to vector<8x32xf32>
    %155 = arith.addf %153, %154 : vector<8x32xf32>
    %156 = arith.addf %155, %116 : vector<8x32xf32>
    %c0_55 = arith.constant 0 : index
    %c0_56 = arith.constant 0 : index
    %c0_57 = arith.constant 0 : index
    %157 = vector.load %arg9[%c0_55, %c0_56, %c0_57] : memref<1x8x32xf32, #tpu.memory_space<vmem>>, vector<1x8x32xf32>
    %158 = vector.shape_cast %157 : vector<1x8x32xf32> to vector<8x32xf32>
    %159 = vector.shape_cast %156 : vector<8x32xf32> to vector<1x8x32xf32>
    tpu.vector_store %arg9[%c0_55, %c0_56, %c0_57], %159 {strides = array<i32>} : memref<1x8x32xf32, #tpu.memory_space<vmem>>, vector<1x8x32xf32>,
    return
  }
  func.func @transform_0(%arg0: i32) -> (i32, i32, i32) {
    %c0_i32 = arith.constant 0 : i32
    %c0_i32_0 = arith.constant 0 : i32
    %c0_i32_1 = arith.constant 0 : i32
    return %arg0, %c0_i32, %c0_i32_0 : i32, i32, i32
  }
  func.func @transform_1(%arg0: i32) -> (i32, i32) {
    %c0_i32 = arith.constant 0 : i32
    %c0_i32_0 = arith.constant 0 : i32
    %c0_i32_1 = arith.constant 0 : i32
    return %c0_i32, %c0_i32_0 : i32, i32
  }
  func.func @transform_2(%arg0: i32) -> (i32, i32) {
    %c0_i32 = arith.constant 0 : i32
    %c0_i32_0 = arith.constant 0 : i32
    %c0_i32_1 = arith.constant 0 : i32
    return %c0_i32, %c0_i32_0 : i32, i32
  }
  func.func @transform_3(%arg0: i32) -> (i32, i32) {
    %c0_i32 = arith.constant 0 : i32
    %c0_i32_0 = arith.constant 0 : i32
    %c0_i32_1 = arith.constant 0 : i32
    return %c0_i32, %c0_i32_0 : i32, i32
  }
  func.func @transform_4(%arg0: i32) -> (i32, i32) {
    %c0_i32 = arith.constant 0 : i32
    %c0_i32_0 = arith.constant 0 : i32
    %c0_i32_1 = arith.constant 0 : i32
    return %c0_i32, %c0_i32_0 : i32, i32
  }
  func.func @transform_5(%arg0: i32) -> (i32, i32) {
    %c0_i32 = arith.constant 0 : i32
    %c0_i32_0 = arith.constant 0 : i32
    %c0_i32_1 = arith.constant 0 : i32
    return %c0_i32, %c0_i32_0 : i32, i32
  }
  func.func @transform_6(%arg0: i32) -> (i32, i32) {
    %c0_i32 = arith.constant 0 : i32
    %c0_i32_0 = arith.constant 0 : i32
    %c0_i32_1 = arith.constant 0 : i32
    return %c0_i32, %c0_i32_0 : i32, i32
  }
  func.func @transform_7(%arg0: i32) -> (i32, i32) {
    %c0_i32 = arith.constant 0 : i32
    %c0_i32_0 = arith.constant 0 : i32
    %c0_i32_1 = arith.constant 0 : i32
    return %c0_i32, %c0_i32_0 : i32, i32
  }
  func.func @transform_8(%arg0: i32) -> (i32, i32, i32) {
    %c0_i32 = arith.constant 0 : i32
    %c0_i32_0 = arith.constant 0 : i32
    %c0_i32_1 = arith.constant 0 : i32
    return %arg0, %c0_i32, %c0_i32_0 : i32, i32, i32
  }
}

</mosaic_0001>

<llo_original>
// kernel: tpu_custom_call.1
$region0: #{tpu_custom_call.1}
  #allocation0 [shape = 'u32[]', space=smem, size = 0x4, offset = 0x4, fixed_abs, tag = 'smem constant byte address 0x4 - core index']
  #allocation1 [shape = 'u32[144,128]{1,0:T(1,128)}', space=vmem, size = 0x12000, scoped, tag = 'internal scratch']
  %s0 = inlined_call_operand.vmem [shape: f32[2,8,32], index: 0, kind: input, shape index: {}]
  %s1 = inlined_call_operand.vmem [shape: f32[32,96], index: 1, kind: input, shape index: {}]
  %s2 = inlined_call_operand.vmem [shape: f32[1,96], index: 2, kind: input, shape index: {}]
  %s3 = inlined_call_operand.vmem [shape: f32[32,32], index: 3, kind: input, shape index: {}]
  %s4 = inlined_call_operand.vmem [shape: f32[6,32], index: 4, kind: input, shape index: {}]
  %s5 = inlined_call_operand.vmem [shape: f32[32,128], index: 5, kind: input, shape index: {}]
  %s6 = inlined_call_operand.vmem [shape: f32[1,128], index: 6, kind: input, shape index: {}]
  %s7 = inlined_call_operand.vmem [shape: f32[128,32], index: 7, kind: input, shape index: {}]
  %s8 = inlined_call_operand.hbm [shape: f32[2,8,32], index: 8, kind: output, shape index: {}]
  %s9 = sld [smem:[#allocation0]]
  $region65: #{tpu_custom_call.1} parent=0
    _
  %s11 = ssub.s32 1, %s9
  %s12 = scalar_select 0, %s11, %s9
  $region1: #{tpu_custom_call.1} parent=0
    #allocation2 [shape = 'u8[8192]{0}', space=vmem, size = 0x2000, scoped, tag = 'output window, operand 0']
    #allocation3 [shape = 's32[2]{0}', space=sflag, size = 0x8, scoped, tag = 'scoped memory for tpu_custom_call.1']
    %13 = vsyncpa [#allocation3], 0
    %s14 = scalar_lea.sflag [#allocation3], 1
    %15 = vsyncpa %s14, 0
    loop: start=0, step=1, limit=4
    $region2: #{tpu_custom_call.1} parent=1 // loop_pre_header
      _
    $region3: #{tpu_custom_call.1} parent=1 // loop_header
      %s17 = sphi 0, %s21
      %p18 = scmp.ge.s32.totalorder %s17, 4
      %s27 = sphi 0, %s29
      %s30 = sphi 0, %s27
      %s31 = sphi 0, %s30
      %s47 = sphi 0, %s31
      %s51 = sphi 0, %s51
      %s53 = sphi 0, %s51
      %s54 = sphi 0, %s53
      %s68 = sphi 0, %s54
      %s72 = sphi 0, %s72
      %s74 = sphi 0, %s72
      %s75 = sphi 0, %s74
      %s89 = sphi 0, %s75
      %s93 = sphi 0, %s93
      %s95 = sphi 0, %s93
      %s96 = sphi 0, %s95
      %s110 = sphi 0, %s96
      %s114 = sphi 0, %s114
      %s116 = sphi 0, %s114
      %s117 = sphi 0, %s116
      %s131 = sphi 0, %s117
      %s135 = sphi 0, %s135
      %s137 = sphi 0, %s135
      %s138 = sphi 0, %s137
      %s152 = sphi 0, %s138
      %s156 = sphi 0, %s156
      %s158 = sphi 0, %s156
      %s159 = sphi 0, %s158
      %s173 = sphi 0, %s159
      %s177 = sphi 0, %s177
      %s179 = sphi 0, %s177
      %s180 = sphi 0, %s179
      %s194 = sphi 0, %s180
      %s200 = sphi 0, %s202
      %s203 = sphi 0, %s200
      %s204 = sphi 0, %s203
      %s220 = sphi 0, %s204
    $region4: #{tpu_custom_call.1} parent=1 // loop_header_branch
      %20 = sbr.rel (%p18) target = $region8
    $region5: #{tpu_custom_call.1} parent=1 // loop_body
      %s22 = ssub.s32 %s17, 1
      %s23 = ssub.s32 %s17, 2
      %s24 = sadd.s32 %s17, 1
      %s25 = ssub.s32 %s17, %s24
      %p26 = scmp.eq.s32.totalorder %s25, 0
      %s28 = sadd.s32 %s27, 1
      %s29 = scalar_select %p26, %s27, %s28
      %p32 = pneg %p26
      %p33 = scmp.eq.s32.totalorder %s17, 1
      %p34 = por %p32, %p33
      %p35 = scmp.ne.s32.totalorder %s27, %s30
      %p36 = scmp.eq.s32.totalorder %s17, 0
      %p37 = por %p35, %p36
      %p38 = scmp.ne.s32.totalorder %s27, %s30
      %p39 = scmp.eq.s32.totalorder %s22, 1
      %p40 = por %p38, %p39
      %p41 = scmp.ne.s32.totalorder %s30, %s31
      %p42 = scmp.eq.s32.totalorder %s22, 0
      %p43 = por %p41, %p42
      %p44 = scmp.ne.s32.totalorder %s30, %s31
      %p45 = scmp.eq.s32.totalorder %s23, 1
      %p46 = por %p44, %p45
      %p48 = scmp.ne.s32.totalorder %s31, %s47
      %p49 = scmp.eq.s32.totalorder %s23, 0
      %p50 = por %p48, %p49
      %s52 = sadd.s32 %s51, 1
      %p55 = scmp.eq.s32.totalorder %s17, 1
      %p56 = scmp.ne.s32.totalorder %s51, %s53
      %p57 = scmp.eq.s32.totalorder %s17, 0
      %p58 = por %p56, %p57
      %p59 = scmp.ne.s32.totalorder %s51, %s53
      %p60 = scmp.eq.s32.totalorder %s22, 1
      %p61 = por %p59, %p60
      %p62 = scmp.ne.s32.totalorder %s53, %s54
      %p63 = scmp.eq.s32.totalorder %s22, 0
      %p64 = por %p62, %p63
      %p65 = scmp.ne.s32.totalorder %s53, %s54
      %p66 = scmp.eq.s32.totalorder %s23, 1
      %p67 = por %p65, %p66
      %p69 = scmp.ne.s32.totalorder %s54, %s68
      %p70 = scmp.eq.s32.totalorder %s23, 0
      %p71 = por %p69, %p70
      %s73 = sadd.s32 %s72, 1
      %p76 = scmp.eq.s32.totalorder %s17, 1
      %p77 = scmp.ne.s32.totalorder %s72, %s74
      %p78 = scmp.eq.s32.totalorder %s17, 0
      %p79 = por %p77, %p78
      %p80 = scmp.ne.s32.totalorder %s72, %s74
      %p81 = scmp.eq.s32.totalorder %s22, 1
      %p82 = por %p80, %p81
      %p83 = scmp.ne.s32.totalorder %s74, %s75
      %p84 = scmp.eq.s32.totalorder %s22, 0
      %p85 = por %p83, %p84
      %p86 = scmp.ne.s32.totalorder %s74, %s75
      %p87 = scmp.eq.s32.totalorder %s23, 1
      %p88 = por %p86, %p87
      %p90 = scmp.ne.s32.totalorder %s75, %s89
      %p91 = scmp.eq.s32.totalorder %s23, 0
      %p92 = por %p90, %p91
      %s94 = sadd.s32 %s93, 1
      %p97 = scmp.eq.s32.totalorder %s17, 1
      %p98 = scmp.ne.s32.totalorder %s93, %s95
      %p99 = scmp.eq.s32.totalorder %s17, 0
      %p100 = por %p98, %p99
      %p101 = scmp.ne.s32.totalorder %s93, %s95
      %p102 = scmp.eq.s32.totalorder %s22, 1
      %p103 = por %p101, %p102
      %p104 = scmp.ne.s32.totalorder %s95, %s96
      %p105 = scmp.eq.s32.totalorder %s22, 0
      %p106 = por %p104, %p105
      %p107 = scmp.ne.s32.totalorder %s95, %s96
      %p108 = scmp.eq.s32.totalorder %s23, 1
      %p109 = por %p107, %p108
      %p111 = scmp.ne.s32.totalorder %s96, %s110
      %p112 = scmp.eq.s32.totalorder %s23, 0
      %p113 = por %p111, %p112
      %s115 = sadd.s32 %s114, 1
      %p118 = scmp.eq.s32.totalorder %s17, 1
      %p119 = scmp.ne.s32.totalorder %s114, %s116
      %p120 = scmp.eq.s32.totalorder %s17, 0
      %p121 = por %p119, %p120
      %p122 = scmp.ne.s32.totalorder %s114, %s116
      %p123 = scmp.eq.s32.totalorder %s22, 1
      %p124 = por %p122, %p123
      %p125 = scmp.ne.s32.totalorder %s116, %s117
      %p126 = scmp.eq.s32.totalorder %s22, 0
      %p127 = por %p125, %p126
      %p128 = scmp.ne.s32.totalorder %s116, %s117
      %p129 = scmp.eq.s32.totalorder %s23, 1
      %p130 = por %p128, %p129
      %p132 = scmp.ne.s32.totalorder %s117, %s131
      %p133 = scmp.eq.s32.totalorder %s23, 0
      %p134 = por %p132, %p133
      %s136 = sadd.s32 %s135, 1
      %p139 = scmp.eq.s32.totalorder %s17, 1
      %p140 = scmp.ne.s32.totalorder %s135, %s137
      %p141 = scmp.eq.s32.totalorder %s17, 0
      %p142 = por %p140, %p141
      %p143 = scmp.ne.s32.totalorder %s135, %s137
      %p144 = scmp.eq.s32.totalorder %s22, 1
      %p145 = por %p143, %p144
      %p146 = scmp.ne.s32.totalorder %s137, %s138
      %p147 = scmp.eq.s32.totalorder %s22, 0
      %p148 = por %p146, %p147
      %p149 = scmp.ne.s32.totalorder %s137, %s138
      %p150 = scmp.eq.s32.totalorder %s23, 1
      %p151 = por %p149, %p150
      %p153 = scmp.ne.s32.totalorder %s138, %s152
      %p154 = scmp.eq.s32.totalorder %s23, 0
      %p155 = por %p153, %p154
      %s157 = sadd.s32 %s156, 1
      %p160 = scmp.eq.s32.totalorder %s17, 1
      %p161 = scmp.ne.s32.totalorder %s156, %s158
      %p162 = scmp.eq.s32.totalorder %s17, 0
      %p163 = por %p161, %p162
      %p164 = scmp.ne.s32.totalorder %s156, %s158
      %p165 = scmp.eq.s32.totalorder %s22, 1
      %p166 = por %p164, %p165
      %p167 = scmp.ne.s32.totalorder %s158, %s159
      %p168 = scmp.eq.s32.totalorder %s22, 0
      %p169 = por %p167, %p168
      %p170 = scmp.ne.s32.totalorder %s158, %s159
      %p171 = scmp.eq.s32.totalorder %s23, 1
      %p172 = por %p170, %p171
      %p174 = scmp.ne.s32.totalorder %s159, %s173
      %p175 = scmp.eq.s32.totalorder %s23, 0
      %p176 = por %p174, %p175
      %s178 = sadd.s32 %s177, 1
      %p181 = scmp.eq.s32.totalorder %s17, 1
      %p182 = scmp.ne.s32.totalorder %s177, %s179
      %p183 = scmp.eq.s32.totalorder %s17, 0
      %p184 = por %p182, %p183
      %p185 = scmp.ne.s32.totalorder %s177, %s179
      %p186 = scmp.eq.s32.totalorder %s22, 1
      %p187 = por %p185, %p186
      %p188 = scmp.ne.s32.totalorder %s179, %s180
      %p189 = scmp.eq.s32.totalorder %s22, 0
      %p190 = por %p188, %p189
      %p191 = scmp.ne.s32.totalorder %s179, %s180
      %p192 = scmp.eq.s32.totalorder %s23, 1
      %p193 = por %p191, %p192
      %p195 = scmp.ne.s32.totalorder %s180, %s194
      %p196 = scmp.eq.s32.totalorder %s23, 0
      %p197 = por %p195, %p196
      %s198 = ssub.s32 %s17, %s24
      %p199 = scmp.eq.s32.totalorder %s198, 0
      %s201 = sadd.s32 %s200, 1
      %s202 = scalar_select %p199, %s200, %s201
      %p205 = pneg %p199
      %p206 = scmp.eq.s32.totalorder %s17, 1
      %p207 = por %p205, %p206
      %p208 = scmp.ne.s32.totalorder %s200, %s203
      %p209 = scmp.eq.s32.totalorder %s17, 0
      %p210 = por %p208, %p209
      %p211 = scmp.ne.s32.totalorder %s200, %s203
      %p212 = scmp.eq.s32.totalorder %s22, 1
      %p213 = por %p211, %p212
      %p214 = scmp.ne.s32.totalorder %s203, %s204
      %p215 = scmp.eq.s32.totalorder %s22, 0
      %p216 = por %p214, %p215
      %p217 = scmp.ne.s32.totalorder %s203, %s204
      %p218 = scmp.eq.s32.totalorder %s23, 1
      %p219 = por %p217, %p218
      %p221 = scmp.ne.s32.totalorder %s204, %s220
      %p222 = scmp.eq.s32.totalorder %s23, 0
      %p223 = por %p221, %p222
      %p224 = scmp.le.s32.totalorder 1, %s17
      %p225 = scmp.lt.s32.totalorder %s17, 3
      %p226 = pnand %p224, %p225
      %p227 = pneg %p226
      // Predicated region
      $region9: #{tpu_custom_call.1} parent=5 // pred_check
        _
      $region10: #{tpu_custom_call.1} parent=5 // pred_check_branch
        %229 = sbr.rel (%p226) target = $region12
      $region11: #{tpu_custom_call.1} parent=5 // pred_region
        %s230 = ssub.s32 %s17, 1
        // Predicated region
        $region13: #{tpu_custom_call.1} parent=11 // pred_check
          %p231 = pneg %p64
        $region14: #{tpu_custom_call.1} parent=11 // pred_check_branch
          %233 = sbr.rel (%p231) target = $region16
        $region15: #{tpu_custom_call.1} parent=11 // pred_region
          _
        $region16: #{tpu_custom_call.1} parent=11 // pred_fallthru
          _
        // Predicated region
        $region17: #{tpu_custom_call.1} parent=11 // pred_check
          %p234 = pneg %p85
        $region18: #{tpu_custom_call.1} parent=11 // pred_check_branch
          %236 = sbr.rel (%p234) target = $region20
        $region19: #{tpu_custom_call.1} parent=11 // pred_region
          _
        $region20: #{tpu_custom_call.1} parent=11 // pred_fallthru
          _
        // Predicated region
        $region21: #{tpu_custom_call.1} parent=11 // pred_check
          %p237 = pneg %p106
        $region22: #{tpu_custom_call.1} parent=11 // pred_check_branch
          %239 = sbr.rel (%p237) target = $region24
        $region23: #{tpu_custom_call.1} parent=11 // pred_region
          _
        $region24: #{tpu_custom_call.1} parent=11 // pred_fallthru
          _
        // Predicated region
        $region25: #{tpu_custom_call.1} parent=11 // pred_check
          %p240 = pneg %p127
        $region26: #{tpu_custom_call.1} parent=11 // pred_check_branch
          %242 = sbr.rel (%p240) target = $region28
        $region27: #{tpu_custom_call.1} parent=11 // pred_region
          _
        $region28: #{tpu_custom_call.1} parent=11 // pred_fallthru
          _
        // Predicated region
        $region29: #{tpu_custom_call.1} parent=11 // pred_check
          %p243 = pneg %p148
        $region30: #{tpu_custom_call.1} parent=11 // pred_check_branch
          %245 = sbr.rel (%p243) target = $region32
        $region31: #{tpu_custom_call.1} parent=11 // pred_region
          _
        $region32: #{tpu_custom_call.1} parent=11 // pred_fallthru
          _
        // Predicated region
        $region33: #{tpu_custom_call.1} parent=11 // pred_check
          %p246 = pneg %p169
        $region34: #{tpu_custom_call.1} parent=11 // pred_check_branch
          %248 = sbr.rel (%p246) target = $region36
        $region35: #{tpu_custom_call.1} parent=11 // pred_region
          _
        $region36: #{tpu_custom_call.1} parent=11 // pred_fallthru
          _
        // Predicated region
        $region37: #{tpu_custom_call.1} parent=11 // pred_check
          %p249 = pneg %p190
        $region38: #{tpu_custom_call.1} parent=11 // pred_check_branch
          %251 = sbr.rel (%p249) target = $region40
        $region39: #{tpu_custom_call.1} parent=11 // pred_region
          _
        $region40: #{tpu_custom_call.1} parent=11 // pred_fallthru
          _
      $region12: #{tpu_custom_call.1} parent=5 // pred_fallthru
        _
      %p252 = scmp.lt.s32.totalorder %s17, 2
      // Predicated region
      $region41: #{tpu_custom_call.1} parent=5 // pred_check
        %p253 = pneg %p252
      $region42: #{tpu_custom_call.1} parent=5 // pred_check_branch
        %255 = sbr.rel (%p253) target = $region44
      $region43: #{tpu_custom_call.1} parent=5 // pred_region
        // Predicated region
        $region45: #{tpu_custom_call.1} parent=43 // pred_check
          %p256 = pneg %p37
        $region46: #{tpu_custom_call.1} parent=43 // pred_check_branch
          %258 = sbr.rel (%p256) target = $region48
        $region47: #{tpu_custom_call.1} parent=43 // pred_region
          %p259 = scmp.lt.s32.totalorder %s17, 1
          %s260 = scalar_select %p259, %s17, 1
          %s261 = smul.addr %s260, 8
          %s262 = scalar_lea.vmem %s0, %s261
        $region48: #{tpu_custom_call.1} parent=43 // pred_fallthru
          _
      $region44: #{tpu_custom_call.1} parent=5 // pred_fallthru
        _
      %p263 = scmp.le.s32.totalorder 1, %s17
      %p264 = scmp.lt.s32.totalorder %s17, 3
      %p265 = pnand %p263, %p264
      %p266 = pneg %p265
      // Predicated region
      $region49: #{tpu_custom_call.1} parent=5 // pred_check
        _
      $region50: #{tpu_custom_call.1} parent=5 // pred_check_branch
        %268 = sbr.rel (%p265) target = $region52
      $region51: #{tpu_custom_call.1} parent=5 // pred_region
        %s269 = ssub.s32 %s17, 1
        %p270 = scmp.lt.s32.totalorder %s22, 1
        %s271 = scalar_select %p270, %s22, 1
        %s272 = smul.addr %s271, 8
        %s273 = scalar_lea.vmem %s0, %s272
        %p274 = pneg %p43
        %p275 = pneg %p40
        %p276 = pneg %p64
        %p277 = pneg %p61
        %p278 = pneg %p85
        %p279 = pneg %p82
        %p280 = pneg %p106
        %p281 = pneg %p103
        %p282 = pneg %p127
        %p283 = pneg %p124
        %p284 = pneg %p148
        %p285 = pneg %p145
        %p286 = pneg %p169
        %p287 = pneg %p166
        %p288 = pneg %p190
        %p289 = pneg %p187
        %p290 = pneg %p216
        %p291 = pneg %p213
        %s292 = sand.u32 %s203, 1
        %s293 = scalar_lea.sflag [#allocation3], %s292
        %s294 = sand.u32 %s203, 1
        %s295 = smul.addr %s294, 8
        %s296 = scalar_lea.vmem [#allocation2], %s295
        %p297 = scmp.lt.s32.totalorder %s22, 1
        %s298 = scalar_select %p297, %s22, 1
        %s299 = smul.addr %s298, 8
        %s300 = scalar_lea.vmem %s0, %s299
        %v301 = vld [vmem:[%s4] sm:$0x3f]
        %v302 = vld [vmem:[%s300] sm:$0xff]
        %vm303 = vcmask 261120
        %v304 = vsel %vm303, %v302, 0.0
        %305 = vadd.xlane.f32.xlu0 %v304
        %v306 = vpop.xlane.xlu0 %305
        %v307 = vrcp.pop 32.0
        %v308 = vmul.f32 %v306, %v307
        %v309 = vsub.f32 %v302, %v308
        %v310 = vmul.f32 %v309, %v309
        %v311 = vsel %vm303, %v310, 0.0
        %312 = vadd.xlane.f32.xlu0 %v311
        %v313 = vpop.xlane.xlu0 %312
        %v314 = vmul.f32 %v313, %v307
        %v315 = vadd.f32 %v314, 1e-05
        %v316 = vrsqrt.pop %v315
        %v317 = vmul.f32 %v309, %v316
        %v318 = vlaneseq
        %v319 = vshrl.u32 %v318, 7
        %v320 = vsub.s32 0, %v319
        %v321 = vrot.slane %v301, %v320
        %v322 = vmul.f32 %v317, %v321
        %v323 = vlaneseq
        %v324 = vshrl.u32 %v323, 7
        %v325 = vsub.s32 1, %v324
        %v326 = vrot.slane %v301, %v325
        %v327 = vadd.f32 %v322, %v326
        %v328 = vld [vmem:[%s1] sm:$0xff]
        %v329 = vld [vmem:[%s1 + $0x8] sm:$0xff]
        %v330 = vld [vmem:[%s1 + $0x10] sm:$0xff]
        %v331 = vld [vmem:[%s1 + $0x18] sm:$0xff]
        %v332 = vld [vmem:[%s2] sm:$0x1]
        %v334 = vlaneseq
        %v335 = vshrl.u32 %v334, 7
        %v336 = vsub.s32 0, %v335
        %v337 = vrot.slane %v332, %v336
        %v340 = vsel %vm303, %v327, 0
        %342 = vmatprep.subr.mxu0 0.0
        %343 = vmatpush1.msra.mxu0 0.0
        %344 = vmatprep.subr.mxu0 0.0
        %345 = vmatpush1.msra.mxu0 0.0
        %346 = vmatprep.subr.mxu0 0.0
        %347 = vmatpush1.msra.mxu0 0.0
        %348 = vmatprep.subr.mxu0 0.0
        %349 = vmatpush1.msra.mxu0 0.0
        %350 = vmatprep.subr.mxu0 0.0
        %351 = vmatpush1.msra.mxu0 0.0
        %352 = vmatprep.subr.mxu0 0.0
        %353 = vmatpush1.msra.mxu0 0.0
        %354 = vmatprep.subr.mxu0 0.0
        %355 = vmatpush1.msra.mxu0 0.0
        %356 = vmatprep.subr.mxu0 0.0
        %357 = vmatpush1.msra.mxu0 0.0
        %358 = vmatprep.subr.mxu0 0.0
        %359 = vmatpush1.msra.mxu0 0.0
        %360 = vmatprep.subr.mxu0 0.0
        %361 = vmatpush1.msra.mxu0 0.0
        %362 = vmatprep.subr.mxu0 0.0
        %363 = vmatpush1.msra.mxu0 0.0
        %364 = vmatprep.subr.mxu0 0.0
        %365 = vmatpush1.msra.mxu0 0.0
        %366 = vmatprep.subr.mxu0 0.0
        %367 = vmatpush1.msra.mxu0 %v331
        %368 = vmatprep.subr.mxu0 0.0
        %369 = vmatpush1.msra.mxu0 %v330
        %370 = vmatprep.subr.mxu0 0.0
        %371 = vmatpush1.msra.mxu0 %v329
        %372 = vmatprep.subr.mxu0 0.0
        %373 = vmatpush1.msra.mxu0 %v328
        %374 = vmatprep.subr.mxu0 0.0
        %375 = vmatpush2.msra.mxu0 0.0
        %376 = vmatprep.subr.mxu0 0.0
        %377 = vmatpush2.msra.mxu0 0.0
        %378 = vmatprep.subr.mxu0 0.0
        %379 = vmatpush2.msra.mxu0 0.0
        %380 = vmatprep.subr.mxu0 0.0
        %381 = vmatpush2.msra.mxu0 0.0
        %382 = vmatprep.subr.mxu0 0.0
        %383 = vmatpush2.msra.mxu0 0.0
        %384 = vmatprep.subr.mxu0 0.0
        %385 = vmatpush2.msra.mxu0 0.0
        %386 = vmatprep.subr.mxu0 0.0
        %387 = vmatpush2.msra.mxu0 0.0
        %388 = vmatprep.subr.mxu0 0.0
        %389 = vmatpush2.msra.mxu0 0.0
        %390 = vmatprep.subr.mxu0 0.0
        %391 = vmatpush2.msra.mxu0 0.0
        %392 = vmatprep.subr.mxu0 0.0
        %393 = vmatpush2.msra.mxu0 0.0
        %394 = vmatprep.subr.mxu0 0.0
        %395 = vmatpush2.msra.mxu0 0.0
        %396 = vmatprep.subr.mxu0 0.0
        %397 = vmatpush2.msra.mxu0 0.0
        %398 = vmatprep.subr.mxu0 0.0
        %399 = vmatpush2.msra.mxu0 0.0
        %400 = vmatprep.subr.mxu0 0.0
        %401 = vmatpush2.msra.mxu0 0.0
        %402 = vmatprep.subr.mxu0 0.0
        %403 = vmatpush2.msra.mxu0 0.0
        %404 = vmatprep.subr.mxu0 0.0
        %405 = vmatpush2.msra.mxu0 0.0
        %406 = vmatprep.mubr.f32.mxu0 0.0
        %407 = vmatmul.mubr.f32.gmra.mxu0 %v340
        %v408 = vpop.f32.mrf.mxu0
        %v409 = vadd.f32 %v337, %v408
        %v410 = vpop.f32.mrf.mxu0
        %411 = vdwg.mxu0
        %v412 = vlaneseq
        %v413 = vshrl.u32 %v412, 7
        %v414 = vlaneseq
        %v415 = vand.u32 %v414, 127
        %vm416 = vcmp.gt.s32.totalorder %v415, %v413
        %418 = vrot.lane.b32.xlu0 %v409, 96
        %v419 = vpop.permute.xlu0 %418
        %vm420 = vcmask 64512
        %v421 = vsel %vm420, %v409, 0
        %v423 = vsel %vm420, %v419, 0
        %425 = vmatprep.subr.mxu0 0.0
        %426 = vmatpush1.xpose.msra.mxu0 0.0
        %427 = vmatprep.subr.mxu0 0.0
        %428 = vmatpush1.xpose.msra.mxu0 0.0
        %429 = vmatprep.subr.mxu0 0.0
        %430 = vmatpush1.xpose.msra.mxu0 0.0
        %431 = vmatprep.subr.mxu0 0.0
        %432 = vmatpush1.xpose.msra.mxu0 0.0
        %433 = vmatprep.subr.mxu0 0.0
        %434 = vmatpush1.xpose.msra.mxu0 0.0
        %435 = vmatprep.subr.mxu0 0.0
        %436 = vmatpush1.xpose.msra.mxu0 0.0
        %437 = vmatprep.subr.mxu0 0.0
        %438 = vmatpush1.xpose.msra.mxu0 0.0
        %439 = vmatprep.subr.mxu0 0.0
        %440 = vmatpush1.xpose.msra.mxu0 0.0
        %441 = vmatprep.subr.mxu0 0.0
        %442 = vmatpush1.xpose.msra.mxu0 0.0
        %443 = vmatprep.subr.mxu0 0.0
        %444 = vmatpush1.xpose.msra.mxu0 0.0
        %445 = vmatprep.subr.mxu0 0.0
        %446 = vmatpush1.xpose.msra.mxu0 0.0
        %447 = vmatprep.subr.mxu0 0.0
        %448 = vmatpush1.xpose.msra.mxu0 0.0
        %449 = vmatprep.subr.mxu0 0.0
        %450 = vmatpush1.xpose.msra.mxu0 0.0
        %451 = vmatprep.subr.mxu0 0.0
        %452 = vmatpush1.xpose.msra.mxu0 0.0
        %453 = vmatprep.subr.mxu0 0.0
        %454 = vmatpush1.xpose.msra.mxu0 0.0
        %455 = vmatprep.subr.mxu0 0.0
        %456 = vmatpush1.xpose.msra.mxu0 %v423
        %457 = vmatprep.subr.mxu0 0.0
        %458 = vmatpush2.xpose.msra.mxu0 0.0
        %459 = vmatprep.subr.mxu0 0.0
        %460 = vmatpush2.xpose.msra.mxu0 0.0
        %461 = vmatprep.subr.mxu0 0.0
        %462 = vmatpush2.xpose.msra.mxu0 0.0
        %463 = vmatprep.subr.mxu0 0.0
        %464 = vmatpush2.xpose.msra.mxu0 0.0
        %465 = vmatprep.subr.mxu0 0.0
        %466 = vmatpush2.xpose.msra.mxu0 0.0
        %467 = vmatprep.subr.mxu0 0.0
        %468 = vmatpush2.xpose.msra.mxu0 0.0
        %469 = vmatprep.subr.mxu0 0.0
        %470 = vmatpush2.xpose.msra.mxu0 0.0
        %471 = vmatprep.subr.mxu0 0.0
        %472 = vmatpush2.xpose.msra.mxu0 0.0
        %473 = vmatprep.subr.mxu0 0.0
        %474 = vmatpush2.xpose.msra.mxu0 0.0
        %475 = vmatprep.subr.mxu0 0.0
        %476 = vmatpush2.xpose.msra.mxu0 0.0
        %477 = vmatprep.subr.mxu0 0.0
        %478 = vmatpush2.xpose.msra.mxu0 0.0
        %479 = vmatprep.subr.mxu0 0.0
        %480 = vmatpush2.xpose.msra.mxu0 0.0
        %481 = vmatprep.subr.mxu0 0.0
        %482 = vmatpush2.xpose.msra.mxu0 0.0
        %483 = vmatprep.subr.mxu0 0.0
        %484 = vmatpush2.xpose.msra.mxu0 0.0
        %485 = vmatprep.subr.mxu0 0.0
        %486 = vmatpush2.xpose.msra.mxu0 0.0
        %487 = vmatprep.subr.mxu0 0.0
        %488 = vmatpush2.xpose.msra.mxu0 0.0
        %489 = vmatprep.mubr.f32.mxu0 0.0
        %490 = vmatmul.mubr.f32.gmra.mxu0 %v421
        %v491 = vpop.f32.mrf.mxu0
        %v492 = vadd.f32 0.0, %v491
        %v493 = vpop.f32.mrf.mxu0
        %494 = vdwg.mxu0
        %v495 = vmul.f32 %v492, 0.35355338
        %v496 = vsel %vm416, -inf, %v495
        %v497 = vsel %vm420, %v496, -inf
        %498 = vmax.xlane.f32.xlu0 %v497
        %v499 = vpop.xlane.xlu0 %498
        %v500 = vsub.f32 %v496, %v499
        %v501 = vmul.f32 %v500, 1.442695
        %v502 = vpow.pop %v501
        %v503 = vsel %vm420, %v502, 0.0
        %504 = vadd.xlane.f32.xlu0 %v503
        %v505 = vpop.xlane.xlu0 %504
        %v506 = vrcp.pop %v505
        %v507 = vmul.f32 %v502, %v506
        %508 = vrot.lane.b32.xlu0 %v409, 64
        %v509 = vpop.permute.xlu0 %508
        %v512 = vsel %vm420, %v507, 0
        %514 = vmatprep.subr.mxu0 0.0
        %515 = vmatpush1.msra.mxu0 0.0
        %516 = vmatprep.subr.mxu0 0.0
        %517 = vmatpush1.msra.mxu0 0.0
        %518 = vmatprep.subr.mxu0 0.0
        %519 = vmatpush1.msra.mxu0 0.0
        %520 = vmatprep.subr.mxu0 0.0
        %521 = vmatpush1.msra.mxu0 0.0
        %522 = vmatprep.subr.mxu0 0.0
        %523 = vmatpush1.msra.mxu0 0.0
        %524 = vmatprep.subr.mxu0 0.0
        %525 = vmatpush1.msra.mxu0 0.0
        %526 = vmatprep.subr.mxu0 0.0
        %527 = vmatpush1.msra.mxu0 0.0
        %528 = vmatprep.subr.mxu0 0.0
        %529 = vmatpush1.msra.mxu0 0.0
        %530 = vmatprep.subr.mxu0 0.0
        %531 = vmatpush1.msra.mxu0 0.0
        %532 = vmatprep.subr.mxu0 0.0
        %533 = vmatpush1.msra.mxu0 0.0
        %534 = vmatprep.subr.mxu0 0.0
        %535 = vmatpush1.msra.mxu0 0.0
        %536 = vmatprep.subr.mxu0 0.0
        %537 = vmatpush1.msra.mxu0 0.0
        %538 = vmatprep.subr.mxu0 0.0
        %539 = vmatpush1.msra.mxu0 0.0
        %540 = vmatprep.subr.mxu0 0.0
        %541 = vmatpush1.msra.mxu0 0.0
        %542 = vmatprep.subr.mxu0 0.0
        %543 = vmatpush1.msra.mxu0 0.0
        %544 = vmatprep.subr.mxu0 0.0
        %545 = vmatpush1.msra.mxu0 %v509
        %546 = vmatprep.subr.mxu0 0.0
        %547 = vmatpush2.msra.mxu0 0.0
        %548 = vmatprep.subr.mxu0 0.0
        %549 = vmatpush2.msra.mxu0 0.0
        %550 = vmatprep.subr.mxu0 0.0
        %551 = vmatpush2.msra.mxu0 0.0
        %552 = vmatprep.subr.mxu0 0.0
        %553 = vmatpush2.msra.mxu0 0.0
        %554 = vmatprep.subr.mxu0 0.0
        %555 = vmatpush2.msra.mxu0 0.0
        %556 = vmatprep.subr.mxu0 0.0
        %557 = vmatpush2.msra.mxu0 0.0
        %558 = vmatprep.subr.mxu0 0.0
        %559 = vmatpush2.msra.mxu0 0.0
        %560 = vmatprep.subr.mxu0 0.0
        %561 = vmatpush2.msra.mxu0 0.0
        %562 = vmatprep.subr.mxu0 0.0
        %563 = vmatpush2.msra.mxu0 0.0
        %564 = vmatprep.subr.mxu0 0.0
        %565 = vmatpush2.msra.mxu0 0.0
        %566 = vmatprep.subr.mxu0 0.0
        %567 = vmatpush2.msra.mxu0 0.0
        %568 = vmatprep.subr.mxu0 0.0
        %569 = vmatpush2.msra.mxu0 0.0
        %570 = vmatprep.subr.mxu0 0.0
        %571 = vmatpush2.msra.mxu0 0.0
        %572 = vmatprep.subr.mxu0 0.0
        %573 = vmatpush2.msra.mxu0 0.0
        %574 = vmatprep.subr.mxu0 0.0
        %575 = vmatpush2.msra.mxu0 0.0
        %576 = vmatprep.subr.mxu0 0.0
        %577 = vmatpush2.msra.mxu0 0.0
        %578 = vmatprep.mubr.f32.mxu0 0.0
        %579 = vmatmul.mubr.f32.gmra.mxu0 %v512
        %v580 = vpop.f32.mrf.mxu0
        %v581 = vadd.f32 0.0, %v580
        %v582 = vpop.f32.mrf.mxu0
        %583 = vdwg.mxu0
        %584 = vrot.lane.b32.xlu0 %v409, 120
        %v585 = vpop.permute.xlu0 %584
        %586 = vrot.lane.b32.xlu0 %v409, 88
        %v587 = vpop.permute.xlu0 %586
        %v588 = vsel %vm420, %v585, 0
        %v590 = vsel %vm420, %v587, 0
        %592 = vmatprep.subr.mxu0 0.0
        %593 = vmatpush1.xpose.msra.mxu0 0.0
        %594 = vmatprep.subr.mxu0 0.0
        %595 = vmatpush1.xpose.msra.mxu0 0.0
        %596 = vmatprep.subr.mxu0 0.0
        %597 = vmatpush1.xpose.msra.mxu0 0.0
        %598 = vmatprep.subr.mxu0 0.0
        %599 = vmatpush1.xpose.msra.mxu0 0.0
        %600 = vmatprep.subr.mxu0 0.0
        %601 = vmatpush1.xpose.msra.mxu0 0.0
        %602 = vmatprep.subr.mxu0 0.0
        %603 = vmatpush1.xpose.msra.mxu0 0.0
        %604 = vmatprep.subr.mxu0 0.0
        %605 = vmatpush1.xpose.msra.mxu0 0.0
        %606 = vmatprep.subr.mxu0 0.0
        %607 = vmatpush1.xpose.msra.mxu0 0.0
        %608 = vmatprep.subr.mxu0 0.0
        %609 = vmatpush1.xpose.msra.mxu0 0.0
        %610 = vmatprep.subr.mxu0 0.0
        %611 = vmatpush1.xpose.msra.mxu0 0.0
        %612 = vmatprep.subr.mxu0 0.0
        %613 = vmatpush1.xpose.msra.mxu0 0.0
        %614 = vmatprep.subr.mxu0 0.0
        %615 = vmatpush1.xpose.msra.mxu0 0.0
        %616 = vmatprep.subr.mxu0 0.0
        %617 = vmatpush1.xpose.msra.mxu0 0.0
        %618 = vmatprep.subr.mxu0 0.0
        %619 = vmatpush1.xpose.msra.mxu0 0.0
        %620 = vmatprep.subr.mxu0 0.0
        %621 = vmatpush1.xpose.msra.mxu0 0.0
        %622 = vmatprep.subr.mxu0 0.0
        %623 = vmatpush1.xpose.msra.mxu0 %v590
        %624 = vmatprep.subr.mxu0 0.0
        %625 = vmatpush2.xpose.msra.mxu0 0.0
        %626 = vmatprep.subr.mxu0 0.0
        %627 = vmatpush2.xpose.msra.mxu0 0.0
        %628 = vmatprep.subr.mxu0 0.0
        %629 = vmatpush2.xpose.msra.mxu0 0.0
        %630 = vmatprep.subr.mxu0 0.0
        %631 = vmatpush2.xpose.msra.mxu0 0.0
        %632 = vmatprep.subr.mxu0 0.0
        %633 = vmatpush2.xpose.msra.mxu0 0.0
        %634 = vmatprep.subr.mxu0 0.0
        %635 = vmatpush2.xpose.msra.mxu0 0.0
        %636 = vmatprep.subr.mxu0 0.0
        %637 = vmatpush2.xpose.msra.mxu0 0.0
        %638 = vmatprep.subr.mxu0 0.0
        %639 = vmatpush2.xpose.msra.mxu0 0.0
        %640 = vmatprep.subr.mxu0 0.0
        %641 = vmatpush2.xpose.msra.mxu0 0.0
        %642 = vmatprep.subr.mxu0 0.0
        %643 = vmatpush2.xpose.msra.mxu0 0.0
        %644 = vmatprep.subr.mxu0 0.0
        %645 = vmatpush2.xpose.msra.mxu0 0.0
        %646 = vmatprep.subr.mxu0 0.0
        %647 = vmatpush2.xpose.msra.mxu0 0.0
        %648 = vmatprep.subr.mxu0 0.0
        %649 = vmatpush2.xpose.msra.mxu0 0.0
        %650 = vmatprep.subr.mxu0 0.0
        %651 = vmatpush2.xpose.msra.mxu0 0.0
        %652 = vmatprep.subr.mxu0 0.0
        %653 = vmatpush2.xpose.msra.mxu0 0.0
        %654 = vmatprep.subr.mxu0 0.0
        %655 = vmatpush2.xpose.msra.mxu0 0.0
        %656 = vmatprep.mubr.f32.mxu0 0.0
        %657 = vmatmul.mubr.f32.gmra.mxu0 %v588
        %v658 = vpop.f32.mrf.mxu0
        %v659 = vadd.f32 0.0, %v658
        %v660 = vpop.f32.mrf.mxu0
        %661 = vdwg.mxu0
        %v662 = vmul.f32 %v659, 0.35355338
        %v663 = vsel %vm416, -inf, %v662
        %v664 = vsel %vm420, %v663, -inf
        %665 = vmax.xlane.f32.xlu0 %v664
        %v666 = vpop.xlane.xlu0 %665
        %v667 = vsub.f32 %v663, %v666
        %v668 = vmul.f32 %v667, 1.442695
        %v669 = vpow.pop %v668
        %v670 = vsel %vm420, %v669, 0.0
        %671 = vadd.xlane.f32.xlu0 %v670
        %v672 = vpop.xlane.xlu0 %671
        %v673 = vrcp.pop %v672
        %v674 = vmul.f32 %v669, %v673
        %675 = vrot.lane.b32.xlu0 %v409, 56
        %v676 = vpop.permute.xlu0 %675
        %v679 = vsel %vm420, %v674, 0
        %681 = vmatprep.subr.mxu0 0.0
        %682 = vmatpush1.msra.mxu0 0.0
        %683 = vmatprep.subr.mxu0 0.0
        %684 = vmatpush1.msra.mxu0 0.0
        %685 = vmatprep.subr.mxu0 0.0
        %686 = vmatpush1.msra.mxu0 0.0
        %687 = vmatprep.subr.mxu0 0.0
        %688 = vmatpush1.msra.mxu0 0.0
        %689 = vmatprep.subr.mxu0 0.0
        %690 = vmatpush1.msra.mxu0 0.0
        %691 = vmatprep.subr.mxu0 0.0
        %692 = vmatpush1.msra.mxu0 0.0
        %693 = vmatprep.subr.mxu0 0.0
        %694 = vmatpush1.msra.mxu0 0.0
        %695 = vmatprep.subr.mxu0 0.0
        %696 = vmatpush1.msra.mxu0 0.0
        %697 = vmatprep.subr.mxu0 0.0
        %698 = vmatpush1.msra.mxu0 0.0
        %699 = vmatprep.subr.mxu0 0.0
        %700 = vmatpush1.msra.mxu0 0.0
        %701 = vmatprep.subr.mxu0 0.0
        %702 = vmatpush1.msra.mxu0 0.0
        %703 = vmatprep.subr.mxu0 0.0
        %704 = vmatpush1.msra.mxu0 0.0
        %705 = vmatprep.subr.mxu0 0.0
        %706 = vmatpush1.msra.mxu0 0.0
        %707 = vmatprep.subr.mxu0 0.0
        %708 = vmatpush1.msra.mxu0 0.0
        %709 = vmatprep.subr.mxu0 0.0
        %710 = vmatpush1.msra.mxu0 0.0
        %711 = vmatprep.subr.mxu0 0.0
        %712 = vmatpush1.msra.mxu0 %v676
        %713 = vmatprep.subr.mxu0 0.0
        %714 = vmatpush2.msra.mxu0 0.0
        %715 = vmatprep.subr.mxu0 0.0
        %716 = vmatpush2.msra.mxu0 0.0
        %717 = vmatprep.subr.mxu0 0.0
        %718 = vmatpush2.msra.mxu0 0.0
        %719 = vmatprep.subr.mxu0 0.0
        %720 = vmatpush2.msra.mxu0 0.0
        %721 = vmatprep.subr.mxu0 0.0
        %722 = vmatpush2.msra.mxu0 0.0
        %723 = vmatprep.subr.mxu0 0.0
        %724 = vmatpush2.msra.mxu0 0.0
        %725 = vmatprep.subr.mxu0 0.0
        %726 = vmatpush2.msra.mxu0 0.0
        %727 = vmatprep.subr.mxu0 0.0
        %728 = vmatpush2.msra.mxu0 0.0
        %729 = vmatprep.subr.mxu0 0.0
        %730 = vmatpush2.msra.mxu0 0.0
        %731 = vmatprep.subr.mxu0 0.0
        %732 = vmatpush2.msra.mxu0 0.0
        %733 = vmatprep.subr.mxu0 0.0
        %734 = vmatpush2.msra.mxu0 0.0
        %735 = vmatprep.subr.mxu0 0.0
        %736 = vmatpush2.msra.mxu0 0.0
        %737 = vmatprep.subr.mxu0 0.0
        %738 = vmatpush2.msra.mxu0 0.0
        %739 = vmatprep.subr.mxu0 0.0
        %740 = vmatpush2.msra.mxu0 0.0
        %741 = vmatprep.subr.mxu0 0.0
        %742 = vmatpush2.msra.mxu0 0.0
        %743 = vmatprep.subr.mxu0 0.0
        %744 = vmatpush2.msra.mxu0 0.0
        %745 = vmatprep.mubr.f32.mxu0 0.0
        %746 = vmatmul.mubr.f32.gmra.mxu0 %v679
        %v747 = vpop.f32.mrf.mxu0
        %v748 = vadd.f32 0.0, %v747
        %v749 = vpop.f32.mrf.mxu0
        %750 = vdwg.mxu0
        %751 = vrot.lane.b32.xlu0 %v409, 112
        %v752 = vpop.permute.xlu0 %751
        %753 = vrot.lane.b32.xlu0 %v409, 80
        %v754 = vpop.permute.xlu0 %753
        %v755 = vsel %vm420, %v752, 0
        %v757 = vsel %vm420, %v754, 0
        %759 = vmatprep.subr.mxu0 0.0
        %760 = vmatpush1.xpose.msra.mxu0 0.0
        %761 = vmatprep.subr.mxu0 0.0
        %762 = vmatpush1.xpose.msra.mxu0 0.0
        %763 = vmatprep.subr.mxu0 0.0
        %764 = vmatpush1.xpose.msra.mxu0 0.0
        %765 = vmatprep.subr.mxu0 0.0
        %766 = vmatpush1.xpose.msra.mxu0 0.0
        %767 = vmatprep.subr.mxu0 0.0
        %768 = vmatpush1.xpose.msra.mxu0 0.0
        %769 = vmatprep.subr.mxu0 0.0
        %770 = vmatpush1.xpose.msra.mxu0 0.0
        %771 = vmatprep.subr.mxu0 0.0
        %772 = vmatpush1.xpose.msra.mxu0 0.0
        %773 = vmatprep.subr.mxu0 0.0
        %774 = vmatpush1.xpose.msra.mxu0 0.0
        %775 = vmatprep.subr.mxu0 0.0
        %776 = vmatpush1.xpose.msra.mxu0 0.0
        %777 = vmatprep.subr.mxu0 0.0
        %778 = vmatpush1.xpose.msra.mxu0 0.0
        %779 = vmatprep.subr.mxu0 0.0
        %780 = vmatpush1.xpose.msra.mxu0 0.0
        %781 = vmatprep.subr.mxu0 0.0
        %782 = vmatpush1.xpose.msra.mxu0 0.0
        %783 = vmatprep.subr.mxu0 0.0
        %784 = vmatpush1.xpose.msra.mxu0 0.0
        %785 = vmatprep.subr.mxu0 0.0
        %786 = vmatpush1.xpose.msra.mxu0 0.0
        %787 = vmatprep.subr.mxu0 0.0
        %788 = vmatpush1.xpose.msra.mxu0 0.0
        %789 = vmatprep.subr.mxu0 0.0
        %790 = vmatpush1.xpose.msra.mxu0 %v757
        %791 = vmatprep.subr.mxu0 0.0
        %792 = vmatpush2.xpose.msra.mxu0 0.0
        %793 = vmatprep.subr.mxu0 0.0
        %794 = vmatpush2.xpose.msra.mxu0 0.0
        %795 = vmatprep.subr.mxu0 0.0
        %796 = vmatpush2.xpose.msra.mxu0 0.0
        %797 = vmatprep.subr.mxu0 0.0
        %798 = vmatpush2.xpose.msra.mxu0 0.0
        %799 = vmatprep.subr.mxu0 0.0
        %800 = vmatpush2.xpose.msra.mxu0 0.0
        %801 = vmatprep.subr.mxu0 0.0
        %802 = vmatpush2.xpose.msra.mxu0 0.0
        %803 = vmatprep.subr.mxu0 0.0
        %804 = vmatpush2.xpose.msra.mxu0 0.0
        %805 = vmatprep.subr.mxu0 0.0
        %806 = vmatpush2.xpose.msra.mxu0 0.0
        %807 = vmatprep.subr.mxu0 0.0
        %808 = vmatpush2.xpose.msra.mxu0 0.0
        %809 = vmatprep.subr.mxu0 0.0
        %810 = vmatpush2.xpose.msra.mxu0 0.0
        %811 = vmatprep.subr.mxu0 0.0
        %812 = vmatpush2.xpose.msra.mxu0 0.0
        %813 = vmatprep.subr.mxu0 0.0
        %814 = vmatpush2.xpose.msra.mxu0 0.0
        %815 = vmatprep.subr.mxu0 0.0
        %816 = vmatpush2.xpose.msra.mxu0 0.0
        %817 = vmatprep.subr.mxu0 0.0
        %818 = vmatpush2.xpose.msra.mxu0 0.0
        %819 = vmatprep.subr.mxu0 0.0
        %820 = vmatpush2.xpose.msra.mxu0 0.0
        %821 = vmatprep.subr.mxu0 0.0
        %822 = vmatpush2.xpose.msra.mxu0 0.0
        %823 = vmatprep.mubr.f32.mxu0 0.0
        %824 = vmatmul.mubr.f32.gmra.mxu0 %v755
        %v825 = vpop.f32.mrf.mxu0
        %v826 = vadd.f32 0.0, %v825
        %v827 = vpop.f32.mrf.mxu0
        %828 = vdwg.mxu0
        %v829 = vmul.f32 %v826, 0.35355338
        %v830 = vsel %vm416, -inf, %v829
        %v831 = vsel %vm420, %v830, -inf
        %832 = vmax.xlane.f32.xlu0 %v831
        %v833 = vpop.xlane.xlu0 %832
        %v834 = vsub.f32 %v830, %v833
        %v835 = vmul.f32 %v834, 1.442695
        %v836 = vpow.pop %v835
        %v837 = vsel %vm420, %v836, 0.0
        %838 = vadd.xlane.f32.xlu0 %v837
        %v839 = vpop.xlane.xlu0 %838
        %v840 = vrcp.pop %v839
        %v841 = vmul.f32 %v836, %v840
        %842 = vrot.lane.b32.xlu0 %v409, 48
        %v843 = vpop.permute.xlu0 %842
        %v846 = vsel %vm420, %v841, 0
        %848 = vmatprep.subr.mxu0 0.0
        %849 = vmatpush1.msra.mxu0 0.0
        %850 = vmatprep.subr.mxu0 0.0
        %851 = vmatpush1.msra.mxu0 0.0
        %852 = vmatprep.subr.mxu0 0.0
        %853 = vmatpush1.msra.mxu0 0.0
        %854 = vmatprep.subr.mxu0 0.0
        %855 = vmatpush1.msra.mxu0 0.0
        %856 = vmatprep.subr.mxu0 0.0
        %857 = vmatpush1.msra.mxu0 0.0
        %858 = vmatprep.subr.mxu0 0.0
        %859 = vmatpush1.msra.mxu0 0.0
        %860 = vmatprep.subr.mxu0 0.0
        %861 = vmatpush1.msra.mxu0 0.0
        %862 = vmatprep.subr.mxu0 0.0
        %863 = vmatpush1.msra.mxu0 0.0
        %864 = vmatprep.subr.mxu0 0.0
        %865 = vmatpush1.msra.mxu0 0.0
        %866 = vmatprep.subr.mxu0 0.0
        %867 = vmatpush1.msra.mxu0 0.0
        %868 = vmatprep.subr.mxu0 0.0
        %869 = vmatpush1.msra.mxu0 0.0
        %870 = vmatprep.subr.mxu0 0.0
        %871 = vmatpush1.msra.mxu0 0.0
        %872 = vmatprep.subr.mxu0 0.0
        %873 = vmatpush1.msra.mxu0 0.0
        %874 = vmatprep.subr.mxu0 0.0
        %875 = vmatpush1.msra.mxu0 0.0
        %876 = vmatprep.subr.mxu0 0.0
        %877 = vmatpush1.msra.mxu0 0.0
        %878 = vmatprep.subr.mxu0 0.0
        %879 = vmatpush1.msra.mxu0 %v843
        %880 = vmatprep.subr.mxu0 0.0
        %881 = vmatpush2.msra.mxu0 0.0
        %882 = vmatprep.subr.mxu0 0.0
        %883 = vmatpush2.msra.mxu0 0.0
        %884 = vmatprep.subr.mxu0 0.0
        %885 = vmatpush2.msra.mxu0 0.0
        %886 = vmatprep.subr.mxu0 0.0
        %887 = vmatpush2.msra.mxu0 0.0
        %888 = vmatprep.subr.mxu0 0.0
        %889 = vmatpush2.msra.mxu0 0.0
        %890 = vmatprep.subr.mxu0 0.0
        %891 = vmatpush2.msra.mxu0 0.0
        %892 = vmatprep.subr.mxu0 0.0
        %893 = vmatpush2.msra.mxu0 0.0
        %894 = vmatprep.subr.mxu0 0.0
        %895 = vmatpush2.msra.mxu0 0.0
        %896 = vmatprep.subr.mxu0 0.0
        %897 = vmatpush2.msra.mxu0 0.0
        %898 = vmatprep.subr.mxu0 0.0
        %899 = vmatpush2.msra.mxu0 0.0
        %900 = vmatprep.subr.mxu0 0.0
        %901 = vmatpush2.msra.mxu0 0.0
        %902 = vmatprep.subr.mxu0 0.0
        %903 = vmatpush2.msra.mxu0 0.0
        %904 = vmatprep.subr.mxu0 0.0
        %905 = vmatpush2.msra.mxu0 0.0
        %906 = vmatprep.subr.mxu0 0.0
        %907 = vmatpush2.msra.mxu0 0.0
        %908 = vmatprep.subr.mxu0 0.0
        %909 = vmatpush2.msra.mxu0 0.0
        %910 = vmatprep.subr.mxu0 0.0
        %911 = vmatpush2.msra.mxu0 0.0
        %912 = vmatprep.mubr.f32.mxu0 0.0
        %913 = vmatmul.mubr.f32.gmra.mxu0 %v846
        %v914 = vpop.f32.mrf.mxu0
        %v915 = vadd.f32 0.0, %v914
        %v916 = vpop.f32.mrf.mxu0
        %917 = vdwg.mxu0
        %918 = vrot.lane.b32.xlu0 %v409, 104
        %v919 = vpop.permute.xlu0 %918
        %920 = vrot.lane.b32.xlu0 %v409, 72
        %v921 = vpop.permute.xlu0 %920
        %v922 = vsel %vm420, %v919, 0
        %v924 = vsel %vm420, %v921, 0
        %926 = vmatprep.subr.mxu0 0.0
        %927 = vmatpush1.xpose.msra.mxu0 0.0
        %928 = vmatprep.subr.mxu0 0.0
        %929 = vmatpush1.xpose.msra.mxu0 0.0
        %930 = vmatprep.subr.mxu0 0.0
        %931 = vmatpush1.xpose.msra.mxu0 0.0
        %932 = vmatprep.subr.mxu0 0.0
        %933 = vmatpush1.xpose.msra.mxu0 0.0
        %934 = vmatprep.subr.mxu0 0.0
        %935 = vmatpush1.xpose.msra.mxu0 0.0
        %936 = vmatprep.subr.mxu0 0.0
        %937 = vmatpush1.xpose.msra.mxu0 0.0
        %938 = vmatprep.subr.mxu0 0.0
        %939 = vmatpush1.xpose.msra.mxu0 0.0
        %940 = vmatprep.subr.mxu0 0.0
        %941 = vmatpush1.xpose.msra.mxu0 0.0
        %942 = vmatprep.subr.mxu0 0.0
        %943 = vmatpush1.xpose.msra.mxu0 0.0
        %944 = vmatprep.subr.mxu0 0.0
        %945 = vmatpush1.xpose.msra.mxu0 0.0
        %946 = vmatprep.subr.mxu0 0.0
        %947 = vmatpush1.xpose.msra.mxu0 0.0
        %948 = vmatprep.subr.mxu0 0.0
        %949 = vmatpush1.xpose.msra.mxu0 0.0
        %950 = vmatprep.subr.mxu0 0.0
        %951 = vmatpush1.xpose.msra.mxu0 0.0
        %952 = vmatprep.subr.mxu0 0.0
        %953 = vmatpush1.xpose.msra.mxu0 0.0
        %954 = vmatprep.subr.mxu0 0.0
        %955 = vmatpush1.xpose.msra.mxu0 0.0
        %956 = vmatprep.subr.mxu0 0.0
        %957 = vmatpush1.xpose.msra.mxu0 %v924
        %958 = vmatprep.subr.mxu0 0.0
        %959 = vmatpush2.xpose.msra.mxu0 0.0
        %960 = vmatprep.subr.mxu0 0.0
        %961 = vmatpush2.xpose.msra.mxu0 0.0
        %962 = vmatprep.subr.mxu0 0.0
        %963 = vmatpush2.xpose.msra.mxu0 0.0
        %964 = vmatprep.subr.mxu0 0.0
        %965 = vmatpush2.xpose.msra.mxu0 0.0
        %966 = vmatprep.subr.mxu0 0.0
        %967 = vmatpush2.xpose.msra.mxu0 0.0
        %968 = vmatprep.subr.mxu0 0.0
        %969 = vmatpush2.xpose.msra.mxu0 0.0
        %970 = vmatprep.subr.mxu0 0.0
        %971 = vmatpush2.xpose.msra.mxu0 0.0
        %972 = vmatprep.subr.mxu0 0.0
        %973 = vmatpush2.xpose.msra.mxu0 0.0
        %974 = vmatprep.subr.mxu0 0.0
        %975 = vmatpush2.xpose.msra.mxu0 0.0
        %976 = vmatprep.subr.mxu0 0.0
        %977 = vmatpush2.xpose.msra.mxu0 0.0
        %978 = vmatprep.subr.mxu0 0.0
        %979 = vmatpush2.xpose.msra.mxu0 0.0
        %980 = vmatprep.subr.mxu0 0.0
        %981 = vmatpush2.xpose.msra.mxu0 0.0
        %982 = vmatprep.subr.mxu0 0.0
        %983 = vmatpush2.xpose.msra.mxu0 0.0
        %984 = vmatprep.subr.mxu0 0.0
        %985 = vmatpush2.xpose.msra.mxu0 0.0
        %986 = vmatprep.subr.mxu0 0.0
        %987 = vmatpush2.xpose.msra.mxu0 0.0
        %988 = vmatprep.subr.mxu0 0.0
        %989 = vmatpush2.xpose.msra.mxu0 0.0
        %990 = vmatprep.mubr.f32.mxu0 0.0
        %991 = vmatmul.mubr.f32.gmra.mxu0 %v922
        %v992 = vpop.f32.mrf.mxu0
        %v993 = vadd.f32 0.0, %v992
        %v994 = vpop.f32.mrf.mxu0
        %995 = vdwg.mxu0
        %v996 = vmul.f32 %v993, 0.35355338
        %v997 = vsel %vm416, -inf, %v996
        %v998 = vsel %vm420, %v997, -inf
        %999 = vmax.xlane.f32.xlu0 %v998
        %v1000 = vpop.xlane.xlu0 %999
        %v1001 = vsub.f32 %v997, %v1000
        %v1002 = vmul.f32 %v1001, 1.442695
        %v1003 = vpow.pop %v1002
        %v1004 = vsel %vm420, %v1003, 0.0
        %1005 = vadd.xlane.f32.xlu0 %v1004
        %v1006 = vpop.xlane.xlu0 %1005
        %v1007 = vrcp.pop %v1006
        %v1008 = vmul.f32 %v1003, %v1007
        %1009 = vrot.lane.b32.xlu0 %v409, 40
        %v1010 = vpop.permute.xlu0 %1009
        %v1013 = vsel %vm420, %v1008, 0
        %1015 = vmatprep.subr.mxu0 0.0
        %1016 = vmatpush1.msra.mxu0 0.0
        %1017 = vmatprep.subr.mxu0 0.0
        %1018 = vmatpush1.msra.mxu0 0.0
        %1019 = vmatprep.subr.mxu0 0.0
        %1020 = vmatpush1.msra.mxu0 0.0
        %1021 = vmatprep.subr.mxu0 0.0
        %1022 = vmatpush1.msra.mxu0 0.0
        %1023 = vmatprep.subr.mxu0 0.0
        %1024 = vmatpush1.msra.mxu0 0.0
        %1025 = vmatprep.subr.mxu0 0.0
        %1026 = vmatpush1.msra.mxu0 0.0
        %1027 = vmatprep.subr.mxu0 0.0
        %1028 = vmatpush1.msra.mxu0 0.0
        %1029 = vmatprep.subr.mxu0 0.0
        %1030 = vmatpush1.msra.mxu0 0.0
        %1031 = vmatprep.subr.mxu0 0.0
        %1032 = vmatpush1.msra.mxu0 0.0
        %1033 = vmatprep.subr.mxu0 0.0
        %1034 = vmatpush1.msra.mxu0 0.0
        %1035 = vmatprep.subr.mxu0 0.0
        %1036 = vmatpush1.msra.mxu0 0.0
        %1037 = vmatprep.subr.mxu0 0.0
        %1038 = vmatpush1.msra.mxu0 0.0
        %1039 = vmatprep.subr.mxu0 0.0
        %1040 = vmatpush1.msra.mxu0 0.0
        %1041 = vmatprep.subr.mxu0 0.0
        %1042 = vmatpush1.msra.mxu0 0.0
        %1043 = vmatprep.subr.mxu0 0.0
        %1044 = vmatpush1.msra.mxu0 0.0
        %1045 = vmatprep.subr.mxu0 0.0
        %1046 = vmatpush1.msra.mxu0 %v1010
        %1047 = vmatprep.subr.mxu0 0.0
        %1048 = vmatpush2.msra.mxu0 0.0
        %1049 = vmatprep.subr.mxu0 0.0
        %1050 = vmatpush2.msra.mxu0 0.0
        %1051 = vmatprep.subr.mxu0 0.0
        %1052 = vmatpush2.msra.mxu0 0.0
        %1053 = vmatprep.subr.mxu0 0.0
        %1054 = vmatpush2.msra.mxu0 0.0
        %1055 = vmatprep.subr.mxu0 0.0
        %1056 = vmatpush2.msra.mxu0 0.0
        %1057 = vmatprep.subr.mxu0 0.0
        %1058 = vmatpush2.msra.mxu0 0.0
        %1059 = vmatprep.subr.mxu0 0.0
        %1060 = vmatpush2.msra.mxu0 0.0
        %1061 = vmatprep.subr.mxu0 0.0
        %1062 = vmatpush2.msra.mxu0 0.0
        %1063 = vmatprep.subr.mxu0 0.0
        %1064 = vmatpush2.msra.mxu0 0.0
        %1065 = vmatprep.subr.mxu0 0.0
        %1066 = vmatpush2.msra.mxu0 0.0
        %1067 = vmatprep.subr.mxu0 0.0
        %1068 = vmatpush2.msra.mxu0 0.0
        %1069 = vmatprep.subr.mxu0 0.0
        %1070 = vmatpush2.msra.mxu0 0.0
        %1071 = vmatprep.subr.mxu0 0.0
        %1072 = vmatpush2.msra.mxu0 0.0
        %1073 = vmatprep.subr.mxu0 0.0
        %1074 = vmatpush2.msra.mxu0 0.0
        %1075 = vmatprep.subr.mxu0 0.0
        %1076 = vmatpush2.msra.mxu0 0.0
        %1077 = vmatprep.subr.mxu0 0.0
        %1078 = vmatpush2.msra.mxu0 0.0
        %1079 = vmatprep.mubr.f32.mxu0 0.0
        %1080 = vmatmul.mubr.f32.gmra.mxu0 %v1013
        %v1081 = vpop.f32.mrf.mxu0
        %v1082 = vadd.f32 0.0, %v1081
        %v1083 = vpop.f32.mrf.mxu0
        %1084 = vdwg.mxu0
        %1086 = vrot.lane.b32.xlu0 %v748, 8
        %v1087 = vpop.permute.xlu0 %1086
        %1090 = vrot.lane.b32.xlu0 %v915, 16
        %v1091 = vpop.permute.xlu0 %1090
        %1094 = vrot.lane.b32.xlu0 %v1082, 24
        %v1095 = vpop.permute.xlu0 %1094
        %v1097 = vsel %vm420, %v581, %v1087
        %vm1098 = vcmask 130048
        %v1099 = vsel %vm1098, %v1097, %v1091
        %vm1100 = vcmask 195584
        %v1101 = vsel %vm1100, %v1099, %v1095
        %v1102 = vld [vmem:[%s3] sm:$0xff]
        %v1103 = vld [vmem:[%s3 + $0x8] sm:$0xff]
        %v1104 = vld [vmem:[%s3 + $0x10] sm:$0xff]
        %v1105 = vld [vmem:[%s3 + $0x18] sm:$0xff]
        %v1106 = vlaneseq
        %v1107 = vshrl.u32 %v1106, 7
        %v1108 = vsub.s32 2, %v1107
        %v1109 = vrot.slane %v301, %v1108
        %v1111 = vsel %vm303, %v1101, 0
        %1113 = vmatprep.subr.mxu0 0.0
        %1114 = vmatpush1.msra.mxu0 0.0
        %1115 = vmatprep.subr.mxu0 0.0
        %1116 = vmatpush1.msra.mxu0 0.0
        %1117 = vmatprep.subr.mxu0 0.0
        %1118 = vmatpush1.msra.mxu0 0.0
        %1119 = vmatprep.subr.mxu0 0.0
        %1120 = vmatpush1.msra.mxu0 0.0
        %1121 = vmatprep.subr.mxu0 0.0
        %1122 = vmatpush1.msra.mxu0 0.0
        %1123 = vmatprep.subr.mxu0 0.0
        %1124 = vmatpush1.msra.mxu0 0.0
        %1125 = vmatprep.subr.mxu0 0.0
        %1126 = vmatpush1.msra.mxu0 0.0
        %1127 = vmatprep.subr.mxu0 0.0
        %1128 = vmatpush1.msra.mxu0 0.0
        %1129 = vmatprep.subr.mxu0 0.0
        %1130 = vmatpush1.msra.mxu0 0.0
        %1131 = vmatprep.subr.mxu0 0.0
        %1132 = vmatpush1.msra.mxu0 0.0
        %1133 = vmatprep.subr.mxu0 0.0
        %1134 = vmatpush1.msra.mxu0 0.0
        %1135 = vmatprep.subr.mxu0 0.0
        %1136 = vmatpush1.msra.mxu0 0.0
        %1137 = vmatprep.subr.mxu0 0.0
        %1138 = vmatpush1.msra.mxu0 %v1105
        %1139 = vmatprep.subr.mxu0 0.0
        %1140 = vmatpush1.msra.mxu0 %v1104
        %1141 = vmatprep.subr.mxu0 0.0
        %1142 = vmatpush1.msra.mxu0 %v1103
        %1143 = vmatprep.subr.mxu0 0.0
        %1144 = vmatpush1.msra.mxu0 %v1102
        %1145 = vmatprep.subr.mxu0 0.0
        %1146 = vmatpush2.msra.mxu0 0.0
        %1147 = vmatprep.subr.mxu0 0.0
        %1148 = vmatpush2.msra.mxu0 0.0
        %1149 = vmatprep.subr.mxu0 0.0
        %1150 = vmatpush2.msra.mxu0 0.0
        %1151 = vmatprep.subr.mxu0 0.0
        %1152 = vmatpush2.msra.mxu0 0.0
        %1153 = vmatprep.subr.mxu0 0.0
        %1154 = vmatpush2.msra.mxu0 0.0
        %1155 = vmatprep.subr.mxu0 0.0
        %1156 = vmatpush2.msra.mxu0 0.0
        %1157 = vmatprep.subr.mxu0 0.0
        %1158 = vmatpush2.msra.mxu0 0.0
        %1159 = vmatprep.subr.mxu0 0.0
        %1160 = vmatpush2.msra.mxu0 0.0
        %1161 = vmatprep.subr.mxu0 0.0
        %1162 = vmatpush2.msra.mxu0 0.0
        %1163 = vmatprep.subr.mxu0 0.0
        %1164 = vmatpush2.msra.mxu0 0.0
        %1165 = vmatprep.subr.mxu0 0.0
        %1166 = vmatpush2.msra.mxu0 0.0
        %1167 = vmatprep.subr.mxu0 0.0
        %1168 = vmatpush2.msra.mxu0 0.0
        %1169 = vmatprep.subr.mxu0 0.0
        %1170 = vmatpush2.msra.mxu0 0.0
        %1171 = vmatprep.subr.mxu0 0.0
        %1172 = vmatpush2.msra.mxu0 0.0
        %1173 = vmatprep.subr.mxu0 0.0
        %1174 = vmatpush2.msra.mxu0 0.0
        %1175 = vmatprep.subr.mxu0 0.0
        %1176 = vmatpush2.msra.mxu0 0.0
        %1177 = vmatprep.mubr.f32.mxu0 0.0
        %1178 = vmatmul.mubr.f32.gmra.mxu0 %v1111
        %v1179 = vpop.f32.mrf.mxu0
        %v1180 = vadd.f32 %v1109, %v1179
        %v1181 = vpop.f32.mrf.mxu0
        %1182 = vdwg.mxu0
        %v1183 = vadd.f32 %v1180, %v302
        %v1184 = vsel %vm303, %v1183, 0.0
        %1185 = vadd.xlane.f32.xlu0 %v1184
        %v1186 = vpop.xlane.xlu0 %1185
        %v1187 = vmul.f32 %v1186, %v307
        %v1188 = vsub.f32 %v1183, %v1187
        %v1189 = vmul.f32 %v1188, %v1188
        %v1190 = vsel %vm303, %v1189, 0.0
        %1191 = vadd.xlane.f32.xlu0 %v1190
        %v1192 = vpop.xlane.xlu0 %1191
        %v1193 = vmul.f32 %v1192, %v307
        %v1194 = vadd.f32 %v1193, 1e-05
        %v1195 = vrsqrt.pop %v1194
        %v1196 = vmul.f32 %v1188, %v1195
        %v1197 = vlaneseq
        %v1198 = vshrl.u32 %v1197, 7
        %v1199 = vsub.s32 3, %v1198
        %v1200 = vrot.slane %v301, %v1199
        %v1201 = vmul.f32 %v1196, %v1200
        %v1202 = vlaneseq
        %v1203 = vshrl.u32 %v1202, 7
        %v1204 = vsub.s32 4, %v1203
        %v1205 = vrot.slane %v301, %v1204
        %v1206 = vadd.f32 %v1201, %v1205
        %v1207 = vld [vmem:[%s5] sm:$0xff]
        %v1208 = vld [vmem:[%s5 + $0x8] sm:$0xff]
        %v1209 = vld [vmem:[%s5 + $0x10] sm:$0xff]
        %v1210 = vld [vmem:[%s5 + $0x18] sm:$0xff]
        %v1211 = vld [vmem:[%s6] sm:$0x1]
        %v1213 = vlaneseq
        %v1214 = vshrl.u32 %v1213, 7
        %v1215 = vsub.s32 0, %v1214
        %v1216 = vrot.slane %v1211, %v1215
        %v1219 = vsel %vm303, %v1206, 0
        %1221 = vmatprep.subr.mxu0 0.0
        %1222 = vmatpush1.msra.mxu0 0.0
        %1223 = vmatprep.subr.mxu0 0.0
        %1224 = vmatpush1.msra.mxu0 0.0
        %1225 = vmatprep.subr.mxu0 0.0
        %1226 = vmatpush1.msra.mxu0 0.0
        %1227 = vmatprep.subr.mxu0 0.0
        %1228 = vmatpush1.msra.mxu0 0.0
        %1229 = vmatprep.subr.mxu0 0.0
        %1230 = vmatpush1.msra.mxu0 0.0
        %1231 = vmatprep.subr.mxu0 0.0
        %1232 = vmatpush1.msra.mxu0 0.0
        %1233 = vmatprep.subr.mxu0 0.0
        %1234 = vmatpush1.msra.mxu0 0.0
        %1235 = vmatprep.subr.mxu0 0.0
        %1236 = vmatpush1.msra.mxu0 0.0
        %1237 = vmatprep.subr.mxu0 0.0
        %1238 = vmatpush1.msra.mxu0 0.0
        %1239 = vmatprep.subr.mxu0 0.0
        %1240 = vmatpush1.msra.mxu0 0.0
        %1241 = vmatprep.subr.mxu0 0.0
        %1242 = vmatpush1.msra.mxu0 0.0
        %1243 = vmatprep.subr.mxu0 0.0
        %1244 = vmatpush1.msra.mxu0 0.0
        %1245 = vmatprep.subr.mxu0 0.0
        %1246 = vmatpush1.msra.mxu0 %v1210
        %1247 = vmatprep.subr.mxu0 0.0
        %1248 = vmatpush1.msra.mxu0 %v1209
        %1249 = vmatprep.subr.mxu0 0.0
        %1250 = vmatpush1.msra.mxu0 %v1208
        %1251 = vmatprep.subr.mxu0 0.0
        %1252 = vmatpush1.msra.mxu0 %v1207
        %1253 = vmatprep.subr.mxu0 0.0
        %1254 = vmatpush2.msra.mxu0 0.0
        %1255 = vmatprep.subr.mxu0 0.0
        %1256 = vmatpush2.msra.mxu0 0.0
        %1257 = vmatprep.subr.mxu0 0.0
        %1258 = vmatpush2.msra.mxu0 0.0
        %1259 = vmatprep.subr.mxu0 0.0
        %1260 = vmatpush2.msra.mxu0 0.0
        %1261 = vmatprep.subr.mxu0 0.0
        %1262 = vmatpush2.msra.mxu0 0.0
        %1263 = vmatprep.subr.mxu0 0.0
        %1264 = vmatpush2.msra.mxu0 0.0
        %1265 = vmatprep.subr.mxu0 0.0
        %1266 = vmatpush2.msra.mxu0 0.0
        %1267 = vmatprep.subr.mxu0 0.0
        %1268 = vmatpush2.msra.mxu0 0.0
        %1269 = vmatprep.subr.mxu0 0.0
        %1270 = vmatpush2.msra.mxu0 0.0
        %1271 = vmatprep.subr.mxu0 0.0
        %1272 = vmatpush2.msra.mxu0 0.0
        %1273 = vmatprep.subr.mxu0 0.0
        %1274 = vmatpush2.msra.mxu0 0.0
        %1275 = vmatprep.subr.mxu0 0.0
        %1276 = vmatpush2.msra.mxu0 0.0
        %1277 = vmatprep.subr.mxu0 0.0
        %1278 = vmatpush2.msra.mxu0 0.0
        %1279 = vmatprep.subr.mxu0 0.0
        %1280 = vmatpush2.msra.mxu0 0.0
        %1281 = vmatprep.subr.mxu0 0.0
        %1282 = vmatpush2.msra.mxu0 0.0
        %1283 = vmatprep.subr.mxu0 0.0
        %1284 = vmatpush2.msra.mxu0 0.0
        %1285 = vmatprep.mubr.f32.mxu0 0.0
        %1286 = vmatmul.mubr.f32.gmra.mxu0 %v1219
        %v1287 = vpop.f32.mrf.mxu0
        %v1288 = vadd.f32 %v1216, %v1287
        %v1289 = vpop.f32.mrf.mxu0
        %1290 = vdwg.mxu0
        %v1291 = vmul.f32 %v1288, 1.702
        %v1292 = vxor.u32 %v1291, 2147483648
        %v1293 = vmul.f32 %v1292, 1.442695
        %v1294 = vpow.pop %v1293
        %v1295 = vadd.f32 %v1294, 1.0
        %v1296 = vrcp.pop %v1295
        %v1297 = vmul.f32 1.0, %v1296
        %v1298 = vmul.f32 %v1288, %v1297
        %v1299 = vld [vmem:[%s7] sm:$0xff]
        %v1300 = vld [vmem:[%s7 + $0x8] sm:$0xff]
        %v1301 = vld [vmem:[%s7 + $0x10] sm:$0xff]
        %v1302 = vld [vmem:[%s7 + $0x18] sm:$0xff]
        %v1303 = vld [vmem:[%s7 + $0x20] sm:$0xff]
        %v1304 = vld [vmem:[%s7 + $0x28] sm:$0xff]
        %v1305 = vld [vmem:[%s7 + $0x30] sm:$0xff]
        %v1306 = vld [vmem:[%s7 + $0x38] sm:$0xff]
        %v1307 = vld [vmem:[%s7 + $0x40] sm:$0xff]
        %v1308 = vld [vmem:[%s7 + $0x48] sm:$0xff]
        %v1309 = vld [vmem:[%s7 + $0x50] sm:$0xff]
        %v1310 = vld [vmem:[%s7 + $0x58] sm:$0xff]
        %v1311 = vld [vmem:[%s7 + $0x60] sm:$0xff]
        %v1312 = vld [vmem:[%s7 + $0x68] sm:$0xff]
        %v1313 = vld [vmem:[%s7 + $0x70] sm:$0xff]
        %v1314 = vld [vmem:[%s7 + $0x78] sm:$0xff]
        %v1315 = vlaneseq
        %v1316 = vshrl.u32 %v1315, 7
        %v1317 = vsub.s32 5, %v1316
        %v1318 = vrot.slane %v301, %v1317
        %1319 = vmatprep.subr.mxu0 0.0
        %1320 = vmatpush1.msra.mxu0 %v1314
        %1321 = vmatprep.subr.mxu0 0.0
        %1322 = vmatpush1.msra.mxu0 %v1313
        %1323 = vmatprep.subr.mxu0 0.0
        %1324 = vmatpush1.msra.mxu0 %v1312
        %1325 = vmatprep.subr.mxu0 0.0
        %1326 = vmatpush1.msra.mxu0 %v1311
        %1327 = vmatprep.subr.mxu0 0.0
        %1328 = vmatpush1.msra.mxu0 %v1310
        %1329 = vmatprep.subr.mxu0 0.0
        %1330 = vmatpush1.msra.mxu0 %v1309
        %1331 = vmatprep.subr.mxu0 0.0
        %1332 = vmatpush1.msra.mxu0 %v1308
        %1333 = vmatprep.subr.mxu0 0.0
        %1334 = vmatpush1.msra.mxu0 %v1307
        %1335 = vmatprep.subr.mxu0 0.0
        %1336 = vmatpush1.msra.mxu0 %v1306
        %1337 = vmatprep.subr.mxu0 0.0
        %1338 = vmatpush1.msra.mxu0 %v1305
        %1339 = vmatprep.subr.mxu0 0.0
        %1340 = vmatpush1.msra.mxu0 %v1304
        %1341 = vmatprep.subr.mxu0 0.0
        %1342 = vmatpush1.msra.mxu0 %v1303
        %1343 = vmatprep.subr.mxu0 0.0
        %1344 = vmatpush1.msra.mxu0 %v1302
        %1345 = vmatprep.subr.mxu0 0.0
        %1346 = vmatpush1.msra.mxu0 %v1301
        %1347 = vmatprep.subr.mxu0 0.0
        %1348 = vmatpush1.msra.mxu0 %v1300
        %1349 = vmatprep.subr.mxu0 0.0
        %1350 = vmatpush1.msra.mxu0 %v1299
        %1351 = vmatprep.subr.mxu0 0.0
        %1352 = vmatpush2.msra.mxu0 0.0
        %1353 = vmatprep.subr.mxu0 0.0
        %1354 = vmatpush2.msra.mxu0 0.0
        %1355 = vmatprep.subr.mxu0 0.0
        %1356 = vmatpush2.msra.mxu0 0.0
        %1357 = vmatprep.subr.mxu0 0.0
        %1358 = vmatpush2.msra.mxu0 0.0
        %1359 = vmatprep.subr.mxu0 0.0
        %1360 = vmatpush2.msra.mxu0 0.0
        %1361 = vmatprep.subr.mxu0 0.0
        %1362 = vmatpush2.msra.mxu0 0.0
        %1363 = vmatprep.subr.mxu0 0.0
        %1364 = vmatpush2.msra.mxu0 0.0
        %1365 = vmatprep.subr.mxu0 0.0
        %1366 = vmatpush2.msra.mxu0 0.0
        %1367 = vmatprep.subr.mxu0 0.0
        %1368 = vmatpush2.msra.mxu0 0.0
        %1369 = vmatprep.subr.mxu0 0.0
        %1370 = vmatpush2.msra.mxu0 0.0
        %1371 = vmatprep.subr.mxu0 0.0
        %1372 = vmatpush2.msra.mxu0 0.0
        %1373 = vmatprep.subr.mxu0 0.0
        %1374 = vmatpush2.msra.mxu0 0.0
        %1375 = vmatprep.subr.mxu0 0.0
        %1376 = vmatpush2.msra.mxu0 0.0
        %1377 = vmatprep.subr.mxu0 0.0
        %1378 = vmatpush2.msra.mxu0 0.0
        %1379 = vmatprep.subr.mxu0 0.0
        %1380 = vmatpush2.msra.mxu0 0.0
        %1381 = vmatprep.subr.mxu0 0.0
        %1382 = vmatpush2.msra.mxu0 0.0
        %1383 = vmatprep.mubr.f32.mxu0 0.0
        %1384 = vmatmul.mubr.f32.gmra.mxu0 %v1298
        %v1385 = vpop.f32.mrf.mxu0
        %v1386 = vadd.f32 %v1318, %v1385
        %v1387 = vpop.f32.mrf.mxu0
        %1388 = vdwg.mxu0
        %v1389 = vadd.f32 %v1386, %v1183
        %1390 = vst.msk [vmem:[%s296] sm:$0xff] %vm303, %v1389
        %s1391 = sand.u32 %s203, 1
        %s1392 = scalar_lea.sflag [#allocation3], %s1391
        %s1393 = sand.u32 %s203, 1
        %s1394 = smul.addr %s1393, 8
        %s1395 = scalar_lea.vmem [#allocation2], %s1394
        // Predicated region
        $region53: #{tpu_custom_call.1} parent=51 // pred_check
          %p1396 = pneg %p213
        $region54: #{tpu_custom_call.1} parent=51 // pred_check_branch
          %1398 = sbr.rel (%p1396) target = $region56
        $region55: #{tpu_custom_call.1} parent=51 // pred_region
          %s1400 = ssub.s32 128, 128
          %1401 = vsyncadd %s1392, %s1400
          %s1402 = smul.addr %s22, 128
          %s1403 = scalar_lea.hbm %s8, %s1402
          %s1405 = sshll.u32 %s1395, 4
          %s1406 = int_to_ptr.vmem [resolvable:$true] %s1405
          %1408 = dma.vmem_to_hbm [thread:$0]  %s1406, 128, %s1403, %s1392
        $region56: #{tpu_custom_call.1} parent=51 // pred_fallthru
          _
      $region52: #{tpu_custom_call.1} parent=5 // pred_fallthru
        _
      %p1409 = scmp.le.s32.totalorder 2, %s17
      // Predicated region
      $region57: #{tpu_custom_call.1} parent=5 // pred_check
        %p1410 = pneg %p1409
      $region58: #{tpu_custom_call.1} parent=5 // pred_check_branch
        %1412 = sbr.rel (%p1410) target = $region60
      $region59: #{tpu_custom_call.1} parent=5 // pred_region
        %s1413 = ssub.s32 %s17, 2
        // Predicated region
        $region61: #{tpu_custom_call.1} parent=59 // pred_check
          %p1414 = pneg %p219
        $region62: #{tpu_custom_call.1} parent=59 // pred_check_branch
          %1416 = sbr.rel (%p1414) target = $region64
        $region63: #{tpu_custom_call.1} parent=59 // pred_region
          %s1417 = sand.u32 %s204, 1
          %s1418 = scalar_lea.sflag [#allocation3], %s1417
          %s1419 = sand.u32 %s204, 1
          %s1420 = smul.addr %s1419, 8
          %s1421 = scalar_lea.vmem [#allocation2], %s1420
          %1422 = dma.done %s1418, 128
        $region64: #{tpu_custom_call.1} parent=59 // pred_fallthru
          _
      $region60: #{tpu_custom_call.1} parent=5 // pred_fallthru
        _
    $region6: #{tpu_custom_call.1} parent=1 // loop_footer
      %s21 = sadd.s32 1, %s17
    $region7: #{tpu_custom_call.1} parent=1 // loop_footer_branch
      %16 = sbr.rel target = $region3
    $region8: #{tpu_custom_call.1} parent=1 // loop_exit
      _
    %1423 = vsyncpa [#allocation3], 1
    %s1424 = scalar_lea.sflag [#allocation3], 1
    %1425 = vsyncpa %s1424, 1

</llo_original>
